<compile_context>
chip_gen: v7x
topology: tpu7x:2x2x1
jax: 0.10.0
libtpu: 0.0.40
codegen_flags: <defaults>
</compile_context>

<pallas_src>
import functools

import jax
import jax.numpy as jnp
from jax.experimental import pallas as pl
from jax.experimental.pallas import tpu as pltpu


def make_lstm_cls_kernel(B, T, D_in, H, L):
    """Builds the Pallas kernel for the full LSTM_CLS forward pass."""

    def kernel(*refs):
        # refs layout:
        #   [0]                    x_ref     (T*B, D_in)   time-major, flattened
        #   per layer l (3 refs):  wihT (D_l, 4H), whhT (H, 4H), bias (1, 4H)
        #   then                   wfc (1, H), bfc (1, 1)
        #   then                   out_ref (B, 1)
        #   scratch:               precomp (T*B, 4H) VMEM  (lane-dense, reused per layer)
        #                          seq     (T*B, H)  VMEM  (only if L > 1)
        x_ref = refs[0]
        idx = 1
        layer_refs = []
        for _ in range(L):
            layer_refs.append((refs[idx], refs[idx + 1], refs[idx + 2]))
            idx += 3
        wfc_ref = refs[idx]
        bfc_ref = refs[idx + 1]
        out_ref = refs[idx + 2]
        precomp_ref = refs[idx + 3]
        seq_ref = refs[idx + 4] if L > 1 else None

        h_last = None
        for l in range(L):
            wihT_ref, whhT_ref, b_ref = layer_refs[l]

            # ---- Hoisted, lane-dense input projection for the whole sequence ----
            # (T*B, D_l) @ (D_l, 4H) + (1, 4H) -> (T*B, 4H); bias folded in so the
            # recurrence never re-materializes the broadcast.
            src = x_ref[...] if l == 0 else seq_ref[...]
            precomp_ref[...] = (
                jnp.dot(src, wihT_ref[...], preferred_element_type=jnp.float32)
                + b_ref[...]
            )

            whhT = whhT_ref[...]          # (H, 4H): 16 KiB at H=32, hoisted once.
            write_seq = l < L - 1

            # ---- Serial recurrence, fully unrolled (T static & small). ----
            # Only one MXU dot (h @ W_hh^T) per step remains on the h->h chain.
            h = jnp.zeros((B, H), jnp.float32)
            c = jnp.zeros((B, H), jnp.float32)
            for t in range(T):
                row = t * B                                       # static offset
                gates = precomp_ref[row:row + B, :] + jnp.dot(
                    h, whhT, preferred_element_type=jnp.float32
                )                                                 # (B, 4H) [i|f|g|o]
                # One full-width EUP sigmoid pass, then slice the gate blocks.
                s = jax.nn.sigmoid(gates)
                i_g = s[:, 0:H]
                f_g = s[:, H:2 * H]
                o_g = s[:, 3 * H:4 * H]
                g_g = jnp.tanh(gates[:, 2 * H:3 * H])
                c = f_g * c + i_g * g_g
                h = o_g * jnp.tanh(c)
                if write_seq:
                    seq_ref[row:row + B, :] = h
            h_last = h

        # out[:, -1, :] of the top layer == h_last; dropout is identity in eval.
        # Linear(H, 1) as VPU multiply + lane reduction (avoids an N=1 MXU matmul
        # with a 1/128-lane padded output).
        logits = (
            jnp.sum(h_last * wfc_ref[...], axis=-1, keepdims=True) + bfc_ref[...]
        )                                                         # (B, 1)
        out_ref[...] = jax.nn.sigmoid(logits)

    return kernel


def init_params(key, input_dim, hidden_dim, layer_dim):
    """Deterministic synthetic init mimicking PyTorch's U(-1/sqrt(H), 1/sqrt(H))."""
    k = 1.0 / jnp.sqrt(jnp.float32(hidden_dim))
    params = {"layers": [], "wfc": None, "bfc": None}
    for l in range(layer_dim):
        d_in = input_dim if l == 0 else hidden_dim
        key, k1, k2, k3, k4 = jax.random.split(key, 5)
        wih = jax.random.uniform(k1, (4 * hidden_dim, d_in), jnp.float32, -k, k)
        whh = jax.random.uniform(k2, (4 * hidden_dim, hidden_dim), jnp.float32, -k, k)
        bih = jax.random.uniform(k3, (4 * hidden_dim,), jnp.float32, -k, k)
        bhh = jax.random.uniform(k4, (4 * hidden_dim,), jnp.float32, -k, k)
        params["layers"].append((wih, whh, bih, bhh))
    key, k1, k2 = jax.random.split(key, 3)
    kf = 1.0 / jnp.sqrt(jnp.float32(hidden_dim))
    params["wfc"] = jax.random.uniform(k1, (1, hidden_dim), jnp.float32, -kf, kf)
    params["bfc"] = jax.random.uniform(k2, (1,), jnp.float32, -kf, kf)
    return params


@functools.partial(jax.jit, static_argnames=("hidden_dim", "layer_dim"))
def lstm_cls_forward(x, params, *, hidden_dim, layer_dim):
    """x: (B, T, D) batch-first, float32. Returns sigmoid(fc(h_T)) of shape (B, 1)."""
    B, T, D = x.shape
    H, L = hidden_dim, layer_dim

    # Time-major + flattened (T*B, D) so each layer's input projection is one matmul.
    x_tm = jnp.transpose(x, (1, 0, 2)).astype(jnp.float32).reshape(T * B, D)

    inputs = [x_tm]
    for l in range(L):
        wih, whh, bih, bhh = params["layers"][l]
        inputs += [
            wih.T,                                  # (D_l, 4H)
            whh.T,                                  # (H,  4H)
            (bih + bhh).reshape(1, 4 * H),          # (1,  4H) combined, folded into precomp
        ]
    inputs += [params["wfc"].reshape(1, H), params["bfc"].reshape(1, 1)]

    scratch = [pltpu.VMEM((T * B, 4 * H), jnp.float32)]   # lane-dense precomputed gates
    if L > 1:
        scratch.append(pltpu.VMEM((T * B, H), jnp.float32))  # inter-layer sequence

    kernel = make_lstm_cls_kernel(B, T, D, H, L)
    out = pl.pallas_call(
        kernel,
        out_shape=jax.ShapeDtypeStruct((B, 1), jnp.float32),
        in_specs=[pl.BlockSpec(memory_space=pltpu.MemorySpace.VMEM)] * len(inputs),
        out_specs=pl.BlockSpec(memory_space=pltpu.MemorySpace.VMEM),
        scratch_shapes=scratch,
        # Kernel footprint is < 200 KiB; 2 MiB gives ample headroom on all of
        # v5e / v6e / v7x without starving surrounding XLA fusions.
        compiler_params=pltpu.CompilerParams(vmem_limit_bytes=2 * 1024 * 1024),
    )(*inputs)
    return out


def lstm_cls_reference(x, params, *, hidden_dim, layer_dim):
    """Pure-JAX reference matching PyTorch LSTM semantics (exact-f32 matmuls)."""
    B, T, D = x.shape
    H = hidden_dim
    hi = jax.lax.Precision.HIGHEST
    seq = x.astype(jnp.float32)
    for l in range(layer_dim):
        wih, whh, bih, bhh = params["layers"][l]
        h = jnp.zeros((B, H), jnp.float32)
        c = jnp.zeros((B, H), jnp.float32)
        outs = []
        for t in range(T):
            gates = (
                jnp.dot(seq[:, t, :], wih.T, precision=hi)
                + jnp.dot(h, whh.T, precision=hi)
                + bih + bhh
            )
            i_g = jax.nn.sigmoid(gates[:, 0:H])
            f_g = jax.nn.sigmoid(gates[:, H:2 * H])
            g_g = jnp.tanh(gates[:, 2 * H:3 * H])
            o_g = jax.nn.sigmoid(gates[:, 3 * H:4 * H])
            c = f_g * c + i_g * g_g
            h = o_g * jnp.tanh(c)
            outs.append(h)
        seq = jnp.stack(outs, axis=1)  # (B, T, H)
    logits = jnp.dot(seq[:, -1, :], params["wfc"].T, precision=hi) + params["bfc"]
    return jax.nn.sigmoid(logits)


if __name__ == "__main__":
    # Small shapes implied by the module: x is (batch, seq, input_dim).
    B, T, INPUT_DIM, HIDDEN_DIM, LAYER_DIM = 8, 8, 16, 32, 2

    key = jax.random.PRNGKey(0)
    key, kx, kp = jax.random.split(key, 3)
    x = jax.random.normal(kx, (B, T, INPUT_DIM), jnp.float32)
    params = init_params(kp, INPUT_DIM, HIDDEN_DIM, LAYER_DIM)

    out = lstm_cls_forward(x, params, hidden_dim=HIDDEN_DIM, layer_dim=LAYER_DIM)
    out = jax.block_until_ready(out)

    ref = lstm_cls_reference(x, params, hidden_dim=HIDDEN_DIM, layer_dim=LAYER_DIM)
    assert out.shape == (B, 1), out.shape
    # Kernel uses TPU-default matmul precision (bf16 passes); reference is exact
    # f32. The resulting diff is << 2e-3, while any semantic bug (gate order,
    # bias folding, last-step selection) would be ~1e-1.
    assert jnp.allclose(out, ref, atol=2e-3, rtol=2e-3), (out, ref)

    print("KERNEL_OK")
</pallas_src>

<mosaic_0001>
module attributes {stable_mosaic.version = 11 : i64} {
  func.func @kernel(%arg0: memref<64x16xf32, #tpu.memory_space<vmem>>, %arg1: memref<16x128xf32, #tpu.memory_space<vmem>>, %arg2: memref<32x128xf32, #tpu.memory_space<vmem>>, %arg3: memref<1x128xf32, #tpu.memory_space<vmem>>, %arg4: memref<32x128xf32, #tpu.memory_space<vmem>>, %arg5: memref<32x128xf32, #tpu.memory_space<vmem>>, %arg6: memref<1x128xf32, #tpu.memory_space<vmem>>, %arg7: memref<1x32xf32, #tpu.memory_space<vmem>>, %arg8: memref<1x1xf32, #tpu.memory_space<vmem>>, %arg9: memref<8x1xf32, #tpu.memory_space<vmem>>, %arg10: memref<64x128xf32, #tpu.memory_space<vmem>>, %arg11: memref<64x32xf32, #tpu.memory_space<vmem>>) attributes {dimension_semantics = [], scalar_prefetch = 0 : i64, scratch_operands = 2 : i64, tpu.core_type = #tpu.core_type<tc>} {
    %c0 = arith.constant 0 : index
    %c0_0 = arith.constant 0 : index
    %0 = vector.load %arg0[%c0, %c0_0] : memref<64x16xf32, #tpu.memory_space<vmem>>, vector<64x16xf32>
    %c0_1 = arith.constant 0 : index
    %c0_2 = arith.constant 0 : index
    %1 = vector.load %arg1[%c0_1, %c0_2] : memref<16x128xf32, #tpu.memory_space<vmem>>, vector<16x128xf32>
    %cst = arith.constant dense<0.000000e+00> : vector<64x128xf32>
    %2 = tpu.matmul %0, %1, %cst {dimension_numbers = #tpu.dot_dimension_numbers<[1], [0], [0], [1], [0, 0, 1, 1], [], []>} : vector<64x16xf32>, vector<16x128xf32>, vector<64x128xf32> -> vector<64x128xf32>
    %c0_3 = arith.constant 0 : index
    %c0_4 = arith.constant 0 : index
    %3 = vector.load %arg3[%c0_3, %c0_4] : memref<1x128xf32, #tpu.memory_space<vmem>>, vector<1x128xf32>
    %4 = vector.broadcast %3 : vector<1x128xf32> to vector<64x128xf32>
    %5 = arith.addf %2, %4 : vector<64x128xf32>
    %c0_5 = arith.constant 0 : index
    %c0_6 = arith.constant 0 : index
    %6 = vector.load %arg10[%c0_5, %c0_6] : memref<64x128xf32, #tpu.memory_space<vmem>>, vector<64x128xf32>
    tpu.vector_store %arg10[%c0_5, %c0_6], %5 {strides = array<i32>} : memref<64x128xf32, #tpu.memory_space<vmem>>, vector<64x128xf32>,
    %c0_7 = arith.constant 0 : index
    %c0_8 = arith.constant 0 : index
    %7 = vector.load %arg2[%c0_7, %c0_8] : memref<32x128xf32, #tpu.memory_space<vmem>>, vector<32x128xf32>
    %cst_9 = arith.constant 0.000000e+00 : f32
    %8 = vector.broadcast %cst_9 : f32 to vector<8x32xf32>
    %cst_10 = arith.constant 0.000000e+00 : f32
    %9 = vector.broadcast %cst_10 : f32 to vector<8x32xf32>
    %c0_11 = arith.constant 0 : index
    %c0_12 = arith.constant 0 : index
    %10 = vector.load %arg10[%c0_11, %c0_12] : memref<64x128xf32, #tpu.memory_space<vmem>>, vector<8x128xf32>
    %cst_13 = arith.constant dense<0.000000e+00> : vector<8x128xf32>
    %11 = tpu.matmul %8, %7, %cst_13 {dimension_numbers = #tpu.dot_dimension_numbers<[1], [0], [0], [1], [0, 0, 1, 1], [], []>} : vector<8x32xf32>, vector<32x128xf32>, vector<8x128xf32> -> vector<8x128xf32>
    %12 = arith.addf %10, %11 : vector<8x128xf32>
    %13 = arith.negf %12 : vector<8x128xf32>
    %14 = math.exp %13 : vector<8x128xf32>
    %cst_14 = arith.constant 1.000000e+00 : f32
    %15 = vector.broadcast %cst_14 : f32 to vector<8x128xf32>
    %16 = arith.addf %15, %14 : vector<8x128xf32>
    %17 = arith.divf %15, %16 : vector<8x128xf32>
    %18 = vector.extract_strided_slice %17 {offsets = [0, 0], sizes = [8, 32], strides = [1, 1]} : vector<8x128xf32> to vector<8x32xf32>
    %19 = vector.extract_strided_slice %17 {offsets = [0, 32], sizes = [8, 32], strides = [1, 1]} : vector<8x128xf32> to vector<8x32xf32>
    %20 = vector.extract_strided_slice %17 {offsets = [0, 96], sizes = [8, 32], strides = [1, 1]} : vector<8x128xf32> to vector<8x32xf32>
    %21 = vector.extract_strided_slice %12 {offsets = [0, 64], sizes = [8, 32], strides = [1, 1]} : vector<8x128xf32> to vector<8x32xf32>
    %22 = math.tanh %21 : vector<8x32xf32>
    %23 = arith.mulf %19, %9 : vector<8x32xf32>
    %24 = arith.mulf %18, %22 : vector<8x32xf32>
    %25 = arith.addf %23, %24 : vector<8x32xf32>
    %26 = math.tanh %25 : vector<8x32xf32>
    %27 = arith.mulf %20, %26 : vector<8x32xf32>
    %c0_15 = arith.constant 0 : index
    %c0_16 = arith.constant 0 : index
    %28 = vector.load %arg11[%c0_15, %c0_16] : memref<64x32xf32, #tpu.memory_space<vmem>>, vector<8x32xf32>
    tpu.vector_store %arg11[%c0_15, %c0_16], %27 {strides = array<i32>} : memref<64x32xf32, #tpu.memory_space<vmem>>, vector<8x32xf32>,
    %c8 = arith.constant 8 : index
    %c0_17 = arith.constant 0 : index
    %29 = vector.load %arg10[%c8, %c0_17] : memref<64x128xf32, #tpu.memory_space<vmem>>, vector<8x128xf32>
    %cst_18 = arith.constant dense<0.000000e+00> : vector<8x128xf32>
    %30 = tpu.matmul %27, %7, %cst_18 {dimension_numbers = #tpu.dot_dimension_numbers<[1], [0], [0], [1], [0, 0, 1, 1], [], []>} : vector<8x32xf32>, vector<32x128xf32>, vector<8x128xf32> -> vector<8x128xf32>
    %31 = arith.addf %29, %30 : vector<8x128xf32>
    %32 = arith.negf %31 : vector<8x128xf32>
    %33 = math.exp %32 : vector<8x128xf32>
    %cst_19 = arith.constant 1.000000e+00 : f32
    %34 = vector.broadcast %cst_19 : f32 to vector<8x128xf32>
    %35 = arith.addf %34, %33 : vector<8x128xf32>
    %36 = arith.divf %34, %35 : vector<8x128xf32>
    %37 = vector.extract_strided_slice %36 {offsets = [0, 0], sizes = [8, 32], strides = [1, 1]} : vector<8x128xf32> to vector<8x32xf32>
    %38 = vector.extract_strided_slice %36 {offsets = [0, 32], sizes = [8, 32], strides = [1, 1]} : vector<8x128xf32> to vector<8x32xf32>
    %39 = vector.extract_strided_slice %36 {offsets = [0, 96], sizes = [8, 32], strides = [1, 1]} : vector<8x128xf32> to vector<8x32xf32>
    %40 = vector.extract_strided_slice %31 {offsets = [0, 64], sizes = [8, 32], strides = [1, 1]} : vector<8x128xf32> to vector<8x32xf32>
    %41 = math.tanh %40 : vector<8x32xf32>
    %42 = arith.mulf %38, %25 : vector<8x32xf32>
    %43 = arith.mulf %37, %41 : vector<8x32xf32>
    %44 = arith.addf %42, %43 : vector<8x32xf32>
    %45 = math.tanh %44 : vector<8x32xf32>
    %46 = arith.mulf %39, %45 : vector<8x32xf32>
    %c8_20 = arith.constant 8 : index
    %c0_21 = arith.constant 0 : index
    %47 = vector.load %arg11[%c8_20, %c0_21] : memref<64x32xf32, #tpu.memory_space<vmem>>, vector<8x32xf32>
    tpu.vector_store %arg11[%c8_20, %c0_21], %46 {strides = array<i32>} : memref<64x32xf32, #tpu.memory_space<vmem>>, vector<8x32xf32>,
    %c16 = arith.constant 16 : index
    %c0_22 = arith.constant 0 : index
    %48 = vector.load %arg10[%c16, %c0_22] : memref<64x128xf32, #tpu.memory_space<vmem>>, vector<8x128xf32>
    %cst_23 = arith.constant dense<0.000000e+00> : vector<8x128xf32>
    %49 = tpu.matmul %46, %7, %cst_23 {dimension_numbers = #tpu.dot_dimension_numbers<[1], [0], [0], [1], [0, 0, 1, 1], [], []>} : vector<8x32xf32>, vector<32x128xf32>, vector<8x128xf32> -> vector<8x128xf32>
    %50 = arith.addf %48, %49 : vector<8x128xf32>
    %51 = arith.negf %50 : vector<8x128xf32>
    %52 = math.exp %51 : vector<8x128xf32>
    %cst_24 = arith.constant 1.000000e+00 : f32
    %53 = vector.broadcast %cst_24 : f32 to vector<8x128xf32>
    %54 = arith.addf %53, %52 : vector<8x128xf32>
    %55 = arith.divf %53, %54 : vector<8x128xf32>
    %56 = vector.extract_strided_slice %55 {offsets = [0, 0], sizes = [8, 32], strides = [1, 1]} : vector<8x128xf32> to vector<8x32xf32>
    %57 = vector.extract_strided_slice %55 {offsets = [0, 32], sizes = [8, 32], strides = [1, 1]} : vector<8x128xf32> to vector<8x32xf32>
    %58 = vector.extract_strided_slice %55 {offsets = [0, 96], sizes = [8, 32], strides = [1, 1]} : vector<8x128xf32> to vector<8x32xf32>
    %59 = vector.extract_strided_slice %50 {offsets = [0, 64], sizes = [8, 32], strides = [1, 1]} : vector<8x128xf32> to vector<8x32xf32>
    %60 = math.tanh %59 : vector<8x32xf32>
    %61 = arith.mulf %57, %44 : vector<8x32xf32>
    %62 = arith.mulf %56, %60 : vector<8x32xf32>
    %63 = arith.addf %61, %62 : vector<8x32xf32>
    %64 = math.tanh %63 : vector<8x32xf32>
    %65 = arith.mulf %58, %64 : vector<8x32xf32>
    %c16_25 = arith.constant 16 : index
    %c0_26 = arith.constant 0 : index
    %66 = vector.load %arg11[%c16_25, %c0_26] : memref<64x32xf32, #tpu.memory_space<vmem>>, vector<8x32xf32>
    tpu.vector_store %arg11[%c16_25, %c0_26], %65 {strides = array<i32>} : memref<64x32xf32, #tpu.memory_space<vmem>>, vector<8x32xf32>,
    %c24 = arith.constant 24 : index
    %c0_27 = arith.constant 0 : index
    %67 = vector.load %arg10[%c24, %c0_27] : memref<64x128xf32, #tpu.memory_space<vmem>>, vector<8x128xf32>
    %cst_28 = arith.constant dense<0.000000e+00> : vector<8x128xf32>
    %68 = tpu.matmul %65, %7, %cst_28 {dimension_numbers = #tpu.dot_dimension_numbers<[1], [0], [0], [1], [0, 0, 1, 1], [], []>} : vector<8x32xf32>, vector<32x128xf32>, vector<8x128xf32> -> vector<8x128xf32>
    %69 = arith.addf %67, %68 : vector<8x128xf32>
    %70 = arith.negf %69 : vector<8x128xf32>
    %71 = math.exp %70 : vector<8x128xf32>
    %cst_29 = arith.constant 1.000000e+00 : f32
    %72 = vector.broadcast %cst_29 : f32 to vector<8x128xf32>
    %73 = arith.addf %72, %71 : vector<8x128xf32>
    %74 = arith.divf %72, %73 : vector<8x128xf32>
    %75 = vector.extract_strided_slice %74 {offsets = [0, 0], sizes = [8, 32], strides = [1, 1]} : vector<8x128xf32> to vector<8x32xf32>
    %76 = vector.extract_strided_slice %74 {offsets = [0, 32], sizes = [8, 32], strides = [1, 1]} : vector<8x128xf32> to vector<8x32xf32>
    %77 = vector.extract_strided_slice %74 {offsets = [0, 96], sizes = [8, 32], strides = [1, 1]} : vector<8x128xf32> to vector<8x32xf32>
    %78 = vector.extract_strided_slice %69 {offsets = [0, 64], sizes = [8, 32], strides = [1, 1]} : vector<8x128xf32> to vector<8x32xf32>
    %79 = math.tanh %78 : vector<8x32xf32>
    %80 = arith.mulf %76, %63 : vector<8x32xf32>
    %81 = arith.mulf %75, %79 : vector<8x32xf32>
    %82 = arith.addf %80, %81 : vector<8x32xf32>
    %83 = math.tanh %82 : vector<8x32xf32>
    %84 = arith.mulf %77, %83 : vector<8x32xf32>
    %c24_30 = arith.constant 24 : index
    %c0_31 = arith.constant 0 : index
    %85 = vector.load %arg11[%c24_30, %c0_31] : memref<64x32xf32, #tpu.memory_space<vmem>>, vector<8x32xf32>
    tpu.vector_store %arg11[%c24_30, %c0_31], %84 {strides = array<i32>} : memref<64x32xf32, #tpu.memory_space<vmem>>, vector<8x32xf32>,
    %c32 = arith.constant 32 : index
    %c0_32 = arith.constant 0 : index
    %86 = vector.load %arg10[%c32, %c0_32] : memref<64x128xf32, #tpu.memory_space<vmem>>, vector<8x128xf32>
    %cst_33 = arith.constant dense<0.000000e+00> : vector<8x128xf32>
    %87 = tpu.matmul %84, %7, %cst_33 {dimension_numbers = #tpu.dot_dimension_numbers<[1], [0], [0], [1], [0, 0, 1, 1], [], []>} : vector<8x32xf32>, vector<32x128xf32>, vector<8x128xf32> -> vector<8x128xf32>
    %88 = arith.addf %86, %87 : vector<8x128xf32>
    %89 = arith.negf %88 : vector<8x128xf32>
    %90 = math.exp %89 : vector<8x128xf32>
    %cst_34 = arith.constant 1.000000e+00 : f32
    %91 = vector.broadcast %cst_34 : f32 to vector<8x128xf32>
    %92 = arith.addf %91, %90 : vector<8x128xf32>
    %93 = arith.divf %91, %92 : vector<8x128xf32>
    %94 = vector.extract_strided_slice %93 {offsets = [0, 0], sizes = [8, 32], strides = [1, 1]} : vector<8x128xf32> to vector<8x32xf32>
    %95 = vector.extract_strided_slice %93 {offsets = [0, 32], sizes = [8, 32], strides = [1, 1]} : vector<8x128xf32> to vector<8x32xf32>
    %96 = vector.extract_strided_slice %93 {offsets = [0, 96], sizes = [8, 32], strides = [1, 1]} : vector<8x128xf32> to vector<8x32xf32>
    %97 = vector.extract_strided_slice %88 {offsets = [0, 64], sizes = [8, 32], strides = [1, 1]} : vector<8x128xf32> to vector<8x32xf32>
    %98 = math.tanh %97 : vector<8x32xf32>
    %99 = arith.mulf %95, %82 : vector<8x32xf32>
    %100 = arith.mulf %94, %98 : vector<8x32xf32>
    %101 = arith.addf %99, %100 : vector<8x32xf32>
    %102 = math.tanh %101 : vector<8x32xf32>
    %103 = arith.mulf %96, %102 : vector<8x32xf32>
    %c32_35 = arith.constant 32 : index
    %c0_36 = arith.constant 0 : index
    %104 = vector.load %arg11[%c32_35, %c0_36] : memref<64x32xf32, #tpu.memory_space<vmem>>, vector<8x32xf32>
    tpu.vector_store %arg11[%c32_35, %c0_36], %103 {strides = array<i32>} : memref<64x32xf32, #tpu.memory_space<vmem>>, vector<8x32xf32>,
    %c40 = arith.constant 40 : index
    %c0_37 = arith.constant 0 : index
    %105 = vector.load %arg10[%c40, %c0_37] : memref<64x128xf32, #tpu.memory_space<vmem>>, vector<8x128xf32>
    %cst_38 = arith.constant dense<0.000000e+00> : vector<8x128xf32>
    %106 = tpu.matmul %103, %7, %cst_38 {dimension_numbers = #tpu.dot_dimension_numbers<[1], [0], [0], [1], [0, 0, 1, 1], [], []>} : vector<8x32xf32>, vector<32x128xf32>, vector<8x128xf32> -> vector<8x128xf32>
    %107 = arith.addf %105, %106 : vector<8x128xf32>
    %108 = arith.negf %107 : vector<8x128xf32>
    %109 = math.exp %108 : vector<8x128xf32>
    %cst_39 = arith.constant 1.000000e+00 : f32
    %110 = vector.broadcast %cst_39 : f32 to vector<8x128xf32>
    %111 = arith.addf %110, %109 : vector<8x128xf32>
    %112 = arith.divf %110, %111 : vector<8x128xf32>
    %113 = vector.extract_strided_slice %112 {offsets = [0, 0], sizes = [8, 32], strides = [1, 1]} : vector<8x128xf32> to vector<8x32xf32>
    %114 = vector.extract_strided_slice %112 {offsets = [0, 32], sizes = [8, 32], strides = [1, 1]} : vector<8x128xf32> to vector<8x32xf32>
    %115 = vector.extract_strided_slice %112 {offsets = [0, 96], sizes = [8, 32], strides = [1, 1]} : vector<8x128xf32> to vector<8x32xf32>
    %116 = vector.extract_strided_slice %107 {offsets = [0, 64], sizes = [8, 32], strides = [1, 1]} : vector<8x128xf32> to vector<8x32xf32>
    %117 = math.tanh %116 : vector<8x32xf32>
    %118 = arith.mulf %114, %101 : vector<8x32xf32>
    %119 = arith.mulf %113, %117 : vector<8x32xf32>
    %120 = arith.addf %118, %119 : vector<8x32xf32>
    %121 = math.tanh %120 : vector<8x32xf32>
    %122 = arith.mulf %115, %121 : vector<8x32xf32>
    %c40_40 = arith.constant 40 : index
    %c0_41 = arith.constant 0 : index
    %123 = vector.load %arg11[%c40_40, %c0_41] : memref<64x32xf32, #tpu.memory_space<vmem>>, vector<8x32xf32>
    tpu.vector_store %arg11[%c40_40, %c0_41], %122 {strides = array<i32>} : memref<64x32xf32, #tpu.memory_space<vmem>>, vector<8x32xf32>,
    %c48 = arith.constant 48 : index
    %c0_42 = arith.constant 0 : index
    %124 = vector.load %arg10[%c48, %c0_42] : memref<64x128xf32, #tpu.memory_space<vmem>>, vector<8x128xf32>
    %cst_43 = arith.constant dense<0.000000e+00> : vector<8x128xf32>
    %125 = tpu.matmul %122, %7, %cst_43 {dimension_numbers = #tpu.dot_dimension_numbers<[1], [0], [0], [1], [0, 0, 1, 1], [], []>} : vector<8x32xf32>, vector<32x128xf32>, vector<8x128xf32> -> vector<8x128xf32>
    %126 = arith.addf %124, %125 : vector<8x128xf32>
    %127 = arith.negf %126 : vector<8x128xf32>
    %128 = math.exp %127 : vector<8x128xf32>
    %cst_44 = arith.constant 1.000000e+00 : f32
    %129 = vector.broadcast %cst_44 : f32 to vector<8x128xf32>
    %130 = arith.addf %129, %128 : vector<8x128xf32>
    %131 = arith.divf %129, %130 : vector<8x128xf32>
    %132 = vector.extract_strided_slice %131 {offsets = [0, 0], sizes = [8, 32], strides = [1, 1]} : vector<8x128xf32> to vector<8x32xf32>
    %133 = vector.extract_strided_slice %131 {offsets = [0, 32], sizes = [8, 32], strides = [1, 1]} : vector<8x128xf32> to vector<8x32xf32>
    %134 = vector.extract_strided_slice %131 {offsets = [0, 96], sizes = [8, 32], strides = [1, 1]} : vector<8x128xf32> to vector<8x32xf32>
    %135 = vector.extract_strided_slice %126 {offsets = [0, 64], sizes = [8, 32], strides = [1, 1]} : vector<8x128xf32> to vector<8x32xf32>
    %136 = math.tanh %135 : vector<8x32xf32>
    %137 = arith.mulf %133, %120 : vector<8x32xf32>
    %138 = arith.mulf %132, %136 : vector<8x32xf32>
    %139 = arith.addf %137, %138 : vector<8x32xf32>
    %140 = math.tanh %139 : vector<8x32xf32>
    %141 = arith.mulf %134, %140 : vector<8x32xf32>
    %c48_45 = arith.constant 48 : index
    %c0_46 = arith.constant 0 : index
    %142 = vector.load %arg11[%c48_45, %c0_46] : memref<64x32xf32, #tpu.memory_space<vmem>>, vector<8x32xf32>
    tpu.vector_store %arg11[%c48_45, %c0_46], %141 {strides = array<i32>} : memref<64x32xf32, #tpu.memory_space<vmem>>, vector<8x32xf32>,
    %c56 = arith.constant 56 : index
    %c0_47 = arith.constant 0 : index
    %143 = vector.load %arg10[%c56, %c0_47] : memref<64x128xf32, #tpu.memory_space<vmem>>, vector<8x128xf32>
    %cst_48 = arith.constant dense<0.000000e+00> : vector<8x128xf32>
    %144 = tpu.matmul %141, %7, %cst_48 {dimension_numbers = #tpu.dot_dimension_numbers<[1], [0], [0], [1], [0, 0, 1, 1], [], []>} : vector<8x32xf32>, vector<32x128xf32>, vector<8x128xf32> -> vector<8x128xf32>
    %145 = arith.addf %143, %144 : vector<8x128xf32>
    %146 = arith.negf %145 : vector<8x128xf32>
    %147 = math.exp %146 : vector<8x128xf32>
    %cst_49 = arith.constant 1.000000e+00 : f32
    %148 = vector.broadcast %cst_49 : f32 to vector<8x128xf32>
    %149 = arith.addf %148, %147 : vector<8x128xf32>
    %150 = arith.divf %148, %149 : vector<8x128xf32>
    %151 = vector.extract_strided_slice %150 {offsets = [0, 0], sizes = [8, 32], strides = [1, 1]} : vector<8x128xf32> to vector<8x32xf32>
    %152 = vector.extract_strided_slice %150 {offsets = [0, 32], sizes = [8, 32], strides = [1, 1]} : vector<8x128xf32> to vector<8x32xf32>
    %153 = vector.extract_strided_slice %150 {offsets = [0, 96], sizes = [8, 32], strides = [1, 1]} : vector<8x128xf32> to vector<8x32xf32>
    %154 = vector.extract_strided_slice %145 {offsets = [0, 64], sizes = [8, 32], strides = [1, 1]} : vector<8x128xf32> to vector<8x32xf32>
    %155 = math.tanh %154 : vector<8x32xf32>
    %156 = arith.mulf %152, %139 : vector<8x32xf32>
    %157 = arith.mulf %151, %155 : vector<8x32xf32>
    %158 = arith.addf %156, %157 : vector<8x32xf32>
    %159 = math.tanh %158 : vector<8x32xf32>
    %160 = arith.mulf %153, %159 : vector<8x32xf32>
    %c56_50 = arith.constant 56 : index
    %c0_51 = arith.constant 0 : index
    %161 = vector.load %arg11[%c56_50, %c0_51] : memref<64x32xf32, #tpu.memory_space<vmem>>, vector<8x32xf32>
    tpu.vector_store %arg11[%c56_50, %c0_51], %160 {strides = array<i32>} : memref<64x32xf32, #tpu.memory_space<vmem>>, vector<8x32xf32>,
    %c0_52 = arith.constant 0 : index
    %c0_53 = arith.constant 0 : index
    %162 = vector.load %arg11[%c0_52, %c0_53] : memref<64x32xf32, #tpu.memory_space<vmem>>, vector<64x32xf32>
    %c0_54 = arith.constant 0 : index
    %c0_55 = arith.constant 0 : index
    %163 = vector.load %arg4[%c0_54, %c0_55] : memref<32x128xf32, #tpu.memory_space<vmem>>, vector<32x128xf32>
    %cst_56 = arith.constant dense<0.000000e+00> : vector<64x128xf32>
    %164 = tpu.matmul %162, %163, %cst_56 {dimension_numbers = #tpu.dot_dimension_numbers<[1], [0], [0], [1], [0, 0, 1, 1], [], []>} : vector<64x32xf32>, vector<32x128xf32>, vector<64x128xf32> -> vector<64x128xf32>
    %c0_57 = arith.constant 0 : index
    %c0_58 = arith.constant 0 : index
    %165 = vector.load %arg6[%c0_57, %c0_58] : memref<1x128xf32, #tpu.memory_space<vmem>>, vector<1x128xf32>
    %166 = vector.broadcast %165 : vector<1x128xf32> to vector<64x128xf32>
    %167 = arith.addf %164, %166 : vector<64x128xf32>
    %c0_59 = arith.constant 0 : index
    %c0_60 = arith.constant 0 : index
    %168 = vector.load %arg10[%c0_59, %c0_60] : memref<64x128xf32, #tpu.memory_space<vmem>>, vector<64x128xf32>
    tpu.vector_store %arg10[%c0_59, %c0_60], %167 {strides = array<i32>} : memref<64x128xf32, #tpu.memory_space<vmem>>, vector<64x128xf32>,
    %c0_61 = arith.constant 0 : index
    %c0_62 = arith.constant 0 : index
    %169 = vector.load %arg5[%c0_61, %c0_62] : memref<32x128xf32, #tpu.memory_space<vmem>>, vector<32x128xf32>
    %cst_63 = arith.constant 0.000000e+00 : f32
    %170 = vector.broadcast %cst_63 : f32 to vector<8x32xf32>
    %cst_64 = arith.constant 0.000000e+00 : f32
    %171 = vector.broadcast %cst_64 : f32 to vector<8x32xf32>
    %c0_65 = arith.constant 0 : index
    %c0_66 = arith.constant 0 : index
    %172 = vector.load %arg10[%c0_65, %c0_66] : memref<64x128xf32, #tpu.memory_space<vmem>>, vector<8x128xf32>
    %cst_67 = arith.constant dense<0.000000e+00> : vector<8x128xf32>
    %173 = tpu.matmul %170, %169, %cst_67 {dimension_numbers = #tpu.dot_dimension_numbers<[1], [0], [0], [1], [0, 0, 1, 1], [], []>} : vector<8x32xf32>, vector<32x128xf32>, vector<8x128xf32> -> vector<8x128xf32>
    %174 = arith.addf %172, %173 : vector<8x128xf32>
    %175 = arith.negf %174 : vector<8x128xf32>
    %176 = math.exp %175 : vector<8x128xf32>
    %cst_68 = arith.constant 1.000000e+00 : f32
    %177 = vector.broadcast %cst_68 : f32 to vector<8x128xf32>
    %178 = arith.addf %177, %176 : vector<8x128xf32>
    %179 = arith.divf %177, %178 : vector<8x128xf32>
    %180 = vector.extract_strided_slice %179 {offsets = [0, 0], sizes = [8, 32], strides = [1, 1]} : vector<8x128xf32> to vector<8x32xf32>
    %181 = vector.extract_strided_slice %179 {offsets = [0, 32], sizes = [8, 32], strides = [1, 1]} : vector<8x128xf32> to vector<8x32xf32>
    %182 = vector.extract_strided_slice %179 {offsets = [0, 96], sizes = [8, 32], strides = [1, 1]} : vector<8x128xf32> to vector<8x32xf32>
    %183 = vector.extract_strided_slice %174 {offsets = [0, 64], sizes = [8, 32], strides = [1, 1]} : vector<8x128xf32> to vector<8x32xf32>
    %184 = math.tanh %183 : vector<8x32xf32>
    %185 = arith.mulf %181, %171 : vector<8x32xf32>
    %186 = arith.mulf %180, %184 : vector<8x32xf32>
    %187 = arith.addf %185, %186 : vector<8x32xf32>
    %188 = math.tanh %187 : vector<8x32xf32>
    %189 = arith.mulf %182, %188 : vector<8x32xf32>
    %c8_69 = arith.constant 8 : index
    %c0_70 = arith.constant 0 : index
    %190 = vector.load %arg10[%c8_69, %c0_70] : memref<64x128xf32, #tpu.memory_space<vmem>>, vector<8x128xf32>
    %cst_71 = arith.constant dense<0.000000e+00> : vector<8x128xf32>
    %191 = tpu.matmul %189, %169, %cst_71 {dimension_numbers = #tpu.dot_dimension_numbers<[1], [0], [0], [1], [0, 0, 1, 1], [], []>} : vector<8x32xf32>, vector<32x128xf32>, vector<8x128xf32> -> vector<8x128xf32>
    %192 = arith.addf %190, %191 : vector<8x128xf32>
    %193 = arith.negf %192 : vector<8x128xf32>
    %194 = math.exp %193 : vector<8x128xf32>
    %cst_72 = arith.constant 1.000000e+00 : f32
    %195 = vector.broadcast %cst_72 : f32 to vector<8x128xf32>
    %196 = arith.addf %195, %194 : vector<8x128xf32>
    %197 = arith.divf %195, %196 : vector<8x128xf32>
    %198 = vector.extract_strided_slice %197 {offsets = [0, 0], sizes = [8, 32], strides = [1, 1]} : vector<8x128xf32> to vector<8x32xf32>
    %199 = vector.extract_strided_slice %197 {offsets = [0, 32], sizes = [8, 32], strides = [1, 1]} : vector<8x128xf32> to vector<8x32xf32>
    %200 = vector.extract_strided_slice %197 {offsets = [0, 96], sizes = [8, 32], strides = [1, 1]} : vector<8x128xf32> to vector<8x32xf32>
    %201 = vector.extract_strided_slice %192 {offsets = [0, 64], sizes = [8, 32], strides = [1, 1]} : vector<8x128xf32> to vector<8x32xf32>
    %202 = math.tanh %201 : vector<8x32xf32>
    %203 = arith.mulf %199, %187 : vector<8x32xf32>
    %204 = arith.mulf %198, %202 : vector<8x32xf32>
    %205 = arith.addf %203, %204 : vector<8x32xf32>
    %206 = math.tanh %205 : vector<8x32xf32>
    %207 = arith.mulf %200, %206 : vector<8x32xf32>
    %c16_73 = arith.constant 16 : index
    %c0_74 = arith.constant 0 : index
    %208 = vector.load %arg10[%c16_73, %c0_74] : memref<64x128xf32, #tpu.memory_space<vmem>>, vector<8x128xf32>
    %cst_75 = arith.constant dense<0.000000e+00> : vector<8x128xf32>
    %209 = tpu.matmul %207, %169, %cst_75 {dimension_numbers = #tpu.dot_dimension_numbers<[1], [0], [0], [1], [0, 0, 1, 1], [], []>} : vector<8x32xf32>, vector<32x128xf32>, vector<8x128xf32> -> vector<8x128xf32>
    %210 = arith.addf %208, %209 : vector<8x128xf32>
    %211 = arith.negf %210 : vector<8x128xf32>
    %212 = math.exp %211 : vector<8x128xf32>
    %cst_76 = arith.constant 1.000000e+00 : f32
    %213 = vector.broadcast %cst_76 : f32 to vector<8x128xf32>
    %214 = arith.addf %213, %212 : vector<8x128xf32>
    %215 = arith.divf %213, %214 : vector<8x128xf32>
    %216 = vector.extract_strided_slice %215 {offsets = [0, 0], sizes = [8, 32], strides = [1, 1]} : vector<8x128xf32> to vector<8x32xf32>
    %217 = vector.extract_strided_slice %215 {offsets = [0, 32], sizes = [8, 32], strides = [1, 1]} : vector<8x128xf32> to vector<8x32xf32>
    %218 = vector.extract_strided_slice %215 {offsets = [0, 96], sizes = [8, 32], strides = [1, 1]} : vector<8x128xf32> to vector<8x32xf32>
    %219 = vector.extract_strided_slice %210 {offsets = [0, 64], sizes = [8, 32], strides = [1, 1]} : vector<8x128xf32> to vector<8x32xf32>
    %220 = math.tanh %219 : vector<8x32xf32>
    %221 = arith.mulf %217, %205 : vector<8x32xf32>
    %222 = arith.mulf %216, %220 : vector<8x32xf32>
    %223 = arith.addf %221, %222 : vector<8x32xf32>
    %224 = math.tanh %223 : vector<8x32xf32>
    %225 = arith.mulf %218, %224 : vector<8x32xf32>
    %c24_77 = arith.constant 24 : index
    %c0_78 = arith.constant 0 : index
    %226 = vector.load %arg10[%c24_77, %c0_78] : memref<64x128xf32, #tpu.memory_space<vmem>>, vector<8x128xf32>
    %cst_79 = arith.constant dense<0.000000e+00> : vector<8x128xf32>
    %227 = tpu.matmul %225, %169, %cst_79 {dimension_numbers = #tpu.dot_dimension_numbers<[1], [0], [0], [1], [0, 0, 1, 1], [], []>} : vector<8x32xf32>, vector<32x128xf32>, vector<8x128xf32> -> vector<8x128xf32>
    %228 = arith.addf %226, %227 : vector<8x128xf32>
    %229 = arith.negf %228 : vector<8x128xf32>
    %230 = math.exp %229 : vector<8x128xf32>
    %cst_80 = arith.constant 1.000000e+00 : f32
    %231 = vector.broadcast %cst_80 : f32 to vector<8x128xf32>
    %232 = arith.addf %231, %230 : vector<8x128xf32>
    %233 = arith.divf %231, %232 : vector<8x128xf32>
    %234 = vector.extract_strided_slice %233 {offsets = [0, 0], sizes = [8, 32], strides = [1, 1]} : vector<8x128xf32> to vector<8x32xf32>
    %235 = vector.extract_strided_slice %233 {offsets = [0, 32], sizes = [8, 32], strides = [1, 1]} : vector<8x128xf32> to vector<8x32xf32>
    %236 = vector.extract_strided_slice %233 {offsets = [0, 96], sizes = [8, 32], strides = [1, 1]} : vector<8x128xf32> to vector<8x32xf32>
    %237 = vector.extract_strided_slice %228 {offsets = [0, 64], sizes = [8, 32], strides = [1, 1]} : vector<8x128xf32> to vector<8x32xf32>
    %238 = math.tanh %237 : vector<8x32xf32>
    %239 = arith.mulf %235, %223 : vector<8x32xf32>
    %240 = arith.mulf %234, %238 : vector<8x32xf32>
    %241 = arith.addf %239, %240 : vector<8x32xf32>
    %242 = math.tanh %241 : vector<8x32xf32>
    %243 = arith.mulf %236, %242 : vector<8x32xf32>
    %c32_81 = arith.constant 32 : index
    %c0_82 = arith.constant 0 : index
    %244 = vector.load %arg10[%c32_81, %c0_82] : memref<64x128xf32, #tpu.memory_space<vmem>>, vector<8x128xf32>
    %cst_83 = arith.constant dense<0.000000e+00> : vector<8x128xf32>
    %245 = tpu.matmul %243, %169, %cst_83 {dimension_numbers = #tpu.dot_dimension_numbers<[1], [0], [0], [1], [0, 0, 1, 1], [], []>} : vector<8x32xf32>, vector<32x128xf32>, vector<8x128xf32> -> vector<8x128xf32>
    %246 = arith.addf %244, %245 : vector<8x128xf32>
    %247 = arith.negf %246 : vector<8x128xf32>
    %248 = math.exp %247 : vector<8x128xf32>
    %cst_84 = arith.constant 1.000000e+00 : f32
    %249 = vector.broadcast %cst_84 : f32 to vector<8x128xf32>
    %250 = arith.addf %249, %248 : vector<8x128xf32>
    %251 = arith.divf %249, %250 : vector<8x128xf32>
    %252 = vector.extract_strided_slice %251 {offsets = [0, 0], sizes = [8, 32], strides = [1, 1]} : vector<8x128xf32> to vector<8x32xf32>
    %253 = vector.extract_strided_slice %251 {offsets = [0, 32], sizes = [8, 32], strides = [1, 1]} : vector<8x128xf32> to vector<8x32xf32>
    %254 = vector.extract_strided_slice %251 {offsets = [0, 96], sizes = [8, 32], strides = [1, 1]} : vector<8x128xf32> to vector<8x32xf32>
    %255 = vector.extract_strided_slice %246 {offsets = [0, 64], sizes = [8, 32], strides = [1, 1]} : vector<8x128xf32> to vector<8x32xf32>
    %256 = math.tanh %255 : vector<8x32xf32>
    %257 = arith.mulf %253, %241 : vector<8x32xf32>
    %258 = arith.mulf %252, %256 : vector<8x32xf32>
    %259 = arith.addf %257, %258 : vector<8x32xf32>
    %260 = math.tanh %259 : vector<8x32xf32>
    %261 = arith.mulf %254, %260 : vector<8x32xf32>
    %c40_85 = arith.constant 40 : index
    %c0_86 = arith.constant 0 : index
    %262 = vector.load %arg10[%c40_85, %c0_86] : memref<64x128xf32, #tpu.memory_space<vmem>>, vector<8x128xf32>
    %cst_87 = arith.constant dense<0.000000e+00> : vector<8x128xf32>
    %263 = tpu.matmul %261, %169, %cst_87 {dimension_numbers = #tpu.dot_dimension_numbers<[1], [0], [0], [1], [0, 0, 1, 1], [], []>} : vector<8x32xf32>, vector<32x128xf32>, vector<8x128xf32> -> vector<8x128xf32>
    %264 = arith.addf %262, %263 : vector<8x128xf32>
    %265 = arith.negf %264 : vector<8x128xf32>
    %266 = math.exp %265 : vector<8x128xf32>
    %cst_88 = arith.constant 1.000000e+00 : f32
    %267 = vector.broadcast %cst_88 : f32 to vector<8x128xf32>
    %268 = arith.addf %267, %266 : vector<8x128xf32>
    %269 = arith.divf %267, %268 : vector<8x128xf32>
    %270 = vector.extract_strided_slice %269 {offsets = [0, 0], sizes = [8, 32], strides = [1, 1]} : vector<8x128xf32> to vector<8x32xf32>
    %271 = vector.extract_strided_slice %269 {offsets = [0, 32], sizes = [8, 32], strides = [1, 1]} : vector<8x128xf32> to vector<8x32xf32>
    %272 = vector.extract_strided_slice %269 {offsets = [0, 96], sizes = [8, 32], strides = [1, 1]} : vector<8x128xf32> to vector<8x32xf32>
    %273 = vector.extract_strided_slice %264 {offsets = [0, 64], sizes = [8, 32], strides = [1, 1]} : vector<8x128xf32> to vector<8x32xf32>
    %274 = math.tanh %273 : vector<8x32xf32>
    %275 = arith.mulf %271, %259 : vector<8x32xf32>
    %276 = arith.mulf %270, %274 : vector<8x32xf32>
    %277 = arith.addf %275, %276 : vector<8x32xf32>
    %278 = math.tanh %277 : vector<8x32xf32>
    %279 = arith.mulf %272, %278 : vector<8x32xf32>
    %c48_89 = arith.constant 48 : index
    %c0_90 = arith.constant 0 : index
    %280 = vector.load %arg10[%c48_89, %c0_90] : memref<64x128xf32, #tpu.memory_space<vmem>>, vector<8x128xf32>
    %cst_91 = arith.constant dense<0.000000e+00> : vector<8x128xf32>
    %281 = tpu.matmul %279, %169, %cst_91 {dimension_numbers = #tpu.dot_dimension_numbers<[1], [0], [0], [1], [0, 0, 1, 1], [], []>} : vector<8x32xf32>, vector<32x128xf32>, vector<8x128xf32> -> vector<8x128xf32>
    %282 = arith.addf %280, %281 : vector<8x128xf32>
    %283 = arith.negf %282 : vector<8x128xf32>
    %284 = math.exp %283 : vector<8x128xf32>
    %cst_92 = arith.constant 1.000000e+00 : f32
    %285 = vector.broadcast %cst_92 : f32 to vector<8x128xf32>
    %286 = arith.addf %285, %284 : vector<8x128xf32>
    %287 = arith.divf %285, %286 : vector<8x128xf32>
    %288 = vector.extract_strided_slice %287 {offsets = [0, 0], sizes = [8, 32], strides = [1, 1]} : vector<8x128xf32> to vector<8x32xf32>
    %289 = vector.extract_strided_slice %287 {offsets = [0, 32], sizes = [8, 32], strides = [1, 1]} : vector<8x128xf32> to vector<8x32xf32>
    %290 = vector.extract_strided_slice %287 {offsets = [0, 96], sizes = [8, 32], strides = [1, 1]} : vector<8x128xf32> to vector<8x32xf32>
    %291 = vector.extract_strided_slice %282 {offsets = [0, 64], sizes = [8, 32], strides = [1, 1]} : vector<8x128xf32> to vector<8x32xf32>
    %292 = math.tanh %291 : vector<8x32xf32>
    %293 = arith.mulf %289, %277 : vector<8x32xf32>
    %294 = arith.mulf %288, %292 : vector<8x32xf32>
    %295 = arith.addf %293, %294 : vector<8x32xf32>
    %296 = math.tanh %295 : vector<8x32xf32>
    %297 = arith.mulf %290, %296 : vector<8x32xf32>
    %c56_93 = arith.constant 56 : index
    %c0_94 = arith.constant 0 : index
    %298 = vector.load %arg10[%c56_93, %c0_94] : memref<64x128xf32, #tpu.memory_space<vmem>>, vector<8x128xf32>
    %cst_95 = arith.constant dense<0.000000e+00> : vector<8x128xf32>
    %299 = tpu.matmul %297, %169, %cst_95 {dimension_numbers = #tpu.dot_dimension_numbers<[1], [0], [0], [1], [0, 0, 1, 1], [], []>} : vector<8x32xf32>, vector<32x128xf32>, vector<8x128xf32> -> vector<8x128xf32>
    %300 = arith.addf %298, %299 : vector<8x128xf32>
    %301 = arith.negf %300 : vector<8x128xf32>
    %302 = math.exp %301 : vector<8x128xf32>
    %cst_96 = arith.constant 1.000000e+00 : f32
    %303 = vector.broadcast %cst_96 : f32 to vector<8x128xf32>
    %304 = arith.addf %303, %302 : vector<8x128xf32>
    %305 = arith.divf %303, %304 : vector<8x128xf32>
    %306 = vector.extract_strided_slice %305 {offsets = [0, 0], sizes = [8, 32], strides = [1, 1]} : vector<8x128xf32> to vector<8x32xf32>
    %307 = vector.extract_strided_slice %305 {offsets = [0, 32], sizes = [8, 32], strides = [1, 1]} : vector<8x128xf32> to vector<8x32xf32>
    %308 = vector.extract_strided_slice %305 {offsets = [0, 96], sizes = [8, 32], strides = [1, 1]} : vector<8x128xf32> to vector<8x32xf32>
    %309 = vector.extract_strided_slice %300 {offsets = [0, 64], sizes = [8, 32], strides = [1, 1]} : vector<8x128xf32> to vector<8x32xf32>
    %310 = math.tanh %309 : vector<8x32xf32>
    %311 = arith.mulf %307, %295 : vector<8x32xf32>
    %312 = arith.mulf %306, %310 : vector<8x32xf32>
    %313 = arith.addf %311, %312 : vector<8x32xf32>
    %314 = math.tanh %313 : vector<8x32xf32>
    %315 = arith.mulf %308, %314 : vector<8x32xf32>
    %c0_97 = arith.constant 0 : index
    %c0_98 = arith.constant 0 : index
    %316 = vector.load %arg7[%c0_97, %c0_98] : memref<1x32xf32, #tpu.memory_space<vmem>>, vector<1x32xf32>
    %317 = vector.broadcast %316 : vector<1x32xf32> to vector<8x32xf32>
    %318 = arith.mulf %315, %317 : vector<8x32xf32>
    %cst_99 = arith.constant dense<0.000000e+00> : vector<8xf32>
    %319 = vector.multi_reduction <add>, %318, %cst_99 [1] : vector<8x32xf32> to vector<8xf32>
    %320 = vector.shape_cast %319 : vector<8xf32> to vector<8x1xf32>
    %c0_100 = arith.constant 0 : index
    %c0_101 = arith.constant 0 : index
    %321 = vector.load %arg8[%c0_100, %c0_101] : memref<1x1xf32, #tpu.memory_space<vmem>>, vector<1x1xf32>
    %322 = vector.broadcast %321 : vector<1x1xf32> to vector<8x1xf32>
    %323 = arith.addf %320, %322 : vector<8x1xf32>
    %324 = arith.negf %323 : vector<8x1xf32>
    %325 = math.exp %324 : vector<8x1xf32>
    %cst_102 = arith.constant 1.000000e+00 : f32
    %326 = vector.broadcast %cst_102 : f32 to vector<8x1xf32>
    %327 = arith.addf %326, %325 : vector<8x1xf32>
    %328 = arith.divf %326, %327 : vector<8x1xf32>
    %c0_103 = arith.constant 0 : index
    %c0_104 = arith.constant 0 : index
    %329 = vector.load %arg9[%c0_103, %c0_104] : memref<8x1xf32, #tpu.memory_space<vmem>>, vector<8x1xf32>
    tpu.vector_store %arg9[%c0_103, %c0_104], %328 {strides = array<i32>} : memref<8x1xf32, #tpu.memory_space<vmem>>, vector<8x1xf32>,
    return
  }
}

</mosaic_0001>

<llo_original>
// kernel: lstm_cls_forward.1
$region0: #{lstm_cls_forward.1}
  #allocation0 [shape = 'u32[]', space=smem, size = 0x4, offset = 0x4, fixed_abs, tag = 'smem constant byte address 0x4 - core index']
  #allocation1 [shape = 'u32[144,128]{1,0:T(1,128)}', space=vmem, size = 0x12000, scoped, tag = 'internal scratch']
  #allocation2 [shape = 'f32[64,128]{1,0:T(8,128)}', space=vmem, size = 0x8000, scoped, tag = 'scratch operand']
  #allocation3 [shape = 'f32[64,32]{1,0:T(8,128)}', space=vmem, size = 0x8000, scoped, tag = 'scratch operand']
  #allocation4 [shape = 'f32[1,1]{1,0:T(1,128)S(1)}', space=vmem, size = 0x200, scoped, tag = 'scoped memory for lstm_cls_forward.1']
  %s0 = inlined_call_operand.vmem [shape: f32[64,16], index: 0, kind: input, shape index: {}]
  %s1 = inlined_call_operand.vmem [shape: f32[16,128], index: 1, kind: input, shape index: {}]
  %s2 = inlined_call_operand.vmem [shape: f32[32,128], index: 2, kind: input, shape index: {}]
  %s3 = inlined_call_operand.vmem [shape: f32[1,128], index: 3, kind: input, shape index: {}]
  %s4 = inlined_call_operand.vmem [shape: f32[32,128], index: 4, kind: input, shape index: {}]
  %s5 = inlined_call_operand.vmem [shape: f32[32,128], index: 5, kind: input, shape index: {}]
  %s6 = inlined_call_operand.vmem [shape: f32[1,128], index: 6, kind: input, shape index: {}]
  %s7 = inlined_call_operand.vmem [shape: f32[1,32], index: 7, kind: input, shape index: {}]
  %s8 = inlined_call_operand.<no memory space> [shape: f32[1,1], index: 8, kind: input, shape index: {}]
  %s9 = inlined_call_operand.vmem [shape: f32[8,1], index: 9, kind: output, shape index: {}]
  %s10 = sld [smem:[#allocation0]]
  $region46: #{lstm_cls_forward.1} parent=0
    _
  %s12 = ssub.s32 1, %s10
  %s13 = scalar_select 0, %s12, %s10
  %v14 = vstv %s8
  %15 = vst [vmem:[#allocation4] sm:$0x1] %v14
  // Predicated region
  $region2: #{lstm_cls_forward.1} parent=0 // pred_check
    _
  $region3: #{lstm_cls_forward.1} parent=0 // pred_check_branch
    %17 = sbr.rel (0) target = $region5
  $region4: #{lstm_cls_forward.1} parent=0 // pred_region
    _
  $region5: #{lstm_cls_forward.1} parent=0 // pred_fallthru
    _
  // Predicated region
  $region6: #{lstm_cls_forward.1} parent=0 // pred_check
    _
  $region7: #{lstm_cls_forward.1} parent=0 // pred_check_branch
    %19 = sbr.rel (0) target = $region9
  $region8: #{lstm_cls_forward.1} parent=0 // pred_region
    _
  $region9: #{lstm_cls_forward.1} parent=0 // pred_fallthru
    _
  // Predicated region
  $region10: #{lstm_cls_forward.1} parent=0 // pred_check
    _
  $region11: #{lstm_cls_forward.1} parent=0 // pred_check_branch
    %21 = sbr.rel (0) target = $region13
  $region12: #{lstm_cls_forward.1} parent=0 // pred_region
    _
  $region13: #{lstm_cls_forward.1} parent=0 // pred_fallthru
    _
  // Predicated region
  $region14: #{lstm_cls_forward.1} parent=0 // pred_check
    _
  $region15: #{lstm_cls_forward.1} parent=0 // pred_check_branch
    %23 = sbr.rel (0) target = $region17
  $region16: #{lstm_cls_forward.1} parent=0 // pred_region
    _
  $region17: #{lstm_cls_forward.1} parent=0 // pred_fallthru
    _
  // Predicated region
  $region18: #{lstm_cls_forward.1} parent=0 // pred_check
    _
  $region19: #{lstm_cls_forward.1} parent=0 // pred_check_branch
    %25 = sbr.rel (0) target = $region21
  $region20: #{lstm_cls_forward.1} parent=0 // pred_region
    _
  $region21: #{lstm_cls_forward.1} parent=0 // pred_fallthru
    _
  // Predicated region
  $region22: #{lstm_cls_forward.1} parent=0 // pred_check
    _
  $region23: #{lstm_cls_forward.1} parent=0 // pred_check_branch
    %27 = sbr.rel (0) target = $region25
  $region24: #{lstm_cls_forward.1} parent=0 // pred_region
    _
  $region25: #{lstm_cls_forward.1} parent=0 // pred_fallthru
    _
  // Predicated region
  $region26: #{lstm_cls_forward.1} parent=0 // pred_check
    _
  $region27: #{lstm_cls_forward.1} parent=0 // pred_check_branch
    %29 = sbr.rel (0) target = $region29
  $region28: #{lstm_cls_forward.1} parent=0 // pred_region
    _
  $region29: #{lstm_cls_forward.1} parent=0 // pred_fallthru
    _
  // Predicated region
  $region30: #{lstm_cls_forward.1} parent=0 // pred_check
    _
  $region31: #{lstm_cls_forward.1} parent=0 // pred_check_branch
    %31 = sbr.rel (0) target = $region33
  $region32: #{lstm_cls_forward.1} parent=0 // pred_region
    _
  $region33: #{lstm_cls_forward.1} parent=0 // pred_fallthru
    _
  // Predicated region
  $region34: #{lstm_cls_forward.1} parent=0 // pred_check
    _
  $region35: #{lstm_cls_forward.1} parent=0 // pred_check_branch
    %33 = sbr.rel (0) target = $region37
  $region36: #{lstm_cls_forward.1} parent=0 // pred_region
    _
  $region37: #{lstm_cls_forward.1} parent=0 // pred_fallthru
    _
  %v34 = vld [vmem:[%s0] sm:$0xff]
  %v35 = vld [vmem:[%s0 + $0x8] sm:$0xff]
  %v36 = vld [vmem:[%s0 + $0x10] sm:$0xff]
  %v37 = vld [vmem:[%s0 + $0x18] sm:$0xff]
  %v38 = vld [vmem:[%s0 + $0x20] sm:$0xff]
  %v39 = vld [vmem:[%s0 + $0x28] sm:$0xff]
  %v40 = vld [vmem:[%s0 + $0x30] sm:$0xff]
  %v41 = vld [vmem:[%s0 + $0x38] sm:$0xff]
  %v42 = vld [vmem:[%s1] sm:$0xff]
  %v43 = vld [vmem:[%s1 + $0x8] sm:$0xff]
  %v44 = vld [vmem:[%s3] sm:$0x1]
  %v46 = vlaneseq
  %v47 = vshrl.u32 %v46, 7
  %v48 = vsub.s32 0, %v47
  %v49 = vrot.slane %v44, %v48
  %vm51 = vcmask 130048
  %v53 = vsel %vm51, %v34, 0
  %v56 = vsel %vm51, %v35, 0
  %v59 = vsel %vm51, %v36, 0
  %v62 = vsel %vm51, %v37, 0
  %v65 = vsel %vm51, %v38, 0
  %v68 = vsel %vm51, %v39, 0
  %v71 = vsel %vm51, %v40, 0
  %v74 = vsel %vm51, %v41, 0
  %76 = vmatprep.subr.mxu0 0.0
  %77 = vmatpush1.msra.mxu0 %v42
  %78 = vmatprep.subr.mxu0 0.0
  %79 = vmatpush1.msra.mxu0 %v43
  %80 = vmatprep.subr.mxu0 0.0
  %81 = vmatpush1.msra.mxu0 0.0
  %82 = vmatprep.subr.mxu0 0.0
  %83 = vmatpush1.msra.mxu0 0.0
  %84 = vmatprep.subr.mxu0 0.0
  %85 = vmatpush1.msra.mxu0 0.0
  %86 = vmatprep.subr.mxu0 0.0
  %87 = vmatpush1.msra.mxu0 0.0
  %88 = vmatprep.subr.mxu0 0.0
  %89 = vmatpush1.msra.mxu0 0.0
  %90 = vmatprep.subr.mxu0 0.0
  %91 = vmatpush1.msra.mxu0 0.0
  %92 = vmatprep.subr.mxu0 0.0
  %93 = vmatpush1.msra.mxu0 0.0
  %94 = vmatprep.subr.mxu0 0.0
  %95 = vmatpush1.msra.mxu0 0.0
  %96 = vmatprep.subr.mxu0 0.0
  %97 = vmatpush1.msra.mxu0 0.0
  %98 = vmatprep.subr.mxu0 0.0
  %99 = vmatpush1.msra.mxu0 0.0
  %100 = vmatprep.subr.mxu0 0.0
  %101 = vmatpush1.msra.mxu0 0.0
  %102 = vmatprep.subr.mxu0 0.0
  %103 = vmatpush1.msra.mxu0 0.0
  %104 = vmatprep.subr.mxu0 0.0
  %105 = vmatpush1.msra.mxu0 0.0
  %106 = vmatprep.subr.mxu0 0.0
  %107 = vmatpush1.msra.mxu0 0.0
  %108 = vmatprep.subr.mxu0 0.0
  %109 = vmatpush1.msra.mxu0 0.0
  %110 = vmatprep.subr.mxu0 0.0
  %111 = vmatpush1.msra.mxu0 0.0
  %112 = vmatprep.subr.mxu0 0.0
  %113 = vmatpush1.msra.mxu0 0.0
  %114 = vmatprep.subr.mxu0 0.0
  %115 = vmatpush1.msra.mxu0 0.0
  %116 = vmatprep.subr.mxu0 0.0
  %117 = vmatpush1.msra.mxu0 0.0
  %118 = vmatprep.subr.mxu0 0.0
  %119 = vmatpush1.msra.mxu0 0.0
  %120 = vmatprep.subr.mxu0 0.0
  %121 = vmatpush1.msra.mxu0 0.0
  %122 = vmatprep.subr.mxu0 0.0
  %123 = vmatpush1.msra.mxu0 0.0
  %124 = vmatprep.subr.mxu0 0.0
  %125 = vmatpush1.msra.mxu0 0.0
  %126 = vmatprep.subr.mxu0 0.0
  %127 = vmatpush1.msra.mxu0 0.0
  %128 = vmatprep.subr.mxu0 0.0
  %129 = vmatpush1.msra.mxu0 0.0
  %130 = vmatprep.subr.mxu0 0.0
  %131 = vmatpush1.msra.mxu0 0.0
  %132 = vmatprep.subr.mxu0 0.0
  %133 = vmatpush1.msra.mxu0 0.0
  %134 = vmatprep.subr.mxu0 0.0
  %135 = vmatpush1.msra.mxu0 0.0
  %136 = vmatprep.subr.mxu0 0.0
  %137 = vmatpush1.msra.mxu0 0.0
  %138 = vmatprep.subr.mxu0 0.0
  %139 = vmatpush1.msra.mxu0 0.0
  %140 = vmatprep.mubr.f32.mxu0 0.0
  %141 = vmatmul.mubr.f32.gmra.mrb[0].mxu0 %v53
  %v142 = vpop.f32.mrb[0].mxu0
  %v143 = vadd.f32 %v49, %v142
  %v144 = vpop.f32.mrb[0].mxu0
  %145 = vmatprep.mubr.f32.mxu0 0.0
  %146 = vmatmul.mubr.f32.gmra.mrb[0].mxu0 %v56
  %v147 = vpop.f32.mrb[0].mxu0
  %v148 = vadd.f32 %v49, %v147
  %v149 = vpop.f32.mrb[0].mxu0
  %150 = vmatprep.mubr.f32.mxu0 0.0
  %151 = vmatmul.mubr.f32.gmra.mrb[0].mxu0 %v59
  %v152 = vpop.f32.mrb[0].mxu0
  %v153 = vadd.f32 %v49, %v152
  %v154 = vpop.f32.mrb[0].mxu0
  %155 = vmatprep.mubr.f32.mxu0 0.0
  %156 = vmatmul.mubr.f32.gmra.mrb[0].mxu0 %v62
  %v157 = vpop.f32.mrb[0].mxu0
  %v158 = vadd.f32 %v49, %v157
  %v159 = vpop.f32.mrb[0].mxu0
  %160 = vmatprep.mubr.f32.mxu0 0.0
  %161 = vmatmul.mubr.f32.gmra.mrb[0].mxu0 %v65
  %v162 = vpop.f32.mrb[0].mxu0
  %v163 = vadd.f32 %v49, %v162
  %v164 = vpop.f32.mrb[0].mxu0
  %165 = vmatprep.mubr.f32.mxu0 0.0
  %166 = vmatmul.mubr.f32.gmra.mrb[0].mxu0 %v68
  %v167 = vpop.f32.mrb[0].mxu0
  %v168 = vadd.f32 %v49, %v167
  %v169 = vpop.f32.mrb[0].mxu0
  %170 = vmatprep.mubr.f32.mxu0 0.0
  %171 = vmatmul.mubr.f32.gmra.mrb[0].mxu0 %v71
  %v172 = vpop.f32.mrb[0].mxu0
  %v173 = vadd.f32 %v49, %v172
  %v174 = vpop.f32.mrb[0].mxu0
  %175 = vmatprep.mubr.f32.mxu0 0.0
  %176 = vmatmul.mubr.f32.gmra.mrb[0].mxu0 %v74
  %v177 = vpop.f32.mrb[0].mxu0
  %v178 = vadd.f32 %v49, %v177
  %v179 = vpop.f32.mrb[0].mxu0
  %180 = vdwg.mxu0
  %181 = vst [vmem:[#allocation2] sm:$0xff] %v143
  %182 = vst [vmem:[#allocation2 + $0x8] sm:$0xff] %v148
  %183 = vst [vmem:[#allocation2 + $0x10] sm:$0xff] %v153
  %184 = vst [vmem:[#allocation2 + $0x18] sm:$0xff] %v158
  %185 = vst [vmem:[#allocation2 + $0x20] sm:$0xff] %v163
  %186 = vst [vmem:[#allocation2 + $0x28] sm:$0xff] %v168
  %187 = vst [vmem:[#allocation2 + $0x30] sm:$0xff] %v173
  %188 = vst [vmem:[#allocation2 + $0x38] sm:$0xff] %v178
  %v189 = vld [vmem:[%s2] sm:$0xff]
  %v190 = vld [vmem:[%s2 + $0x8] sm:$0xff]
  %v191 = vld [vmem:[%s2 + $0x10] sm:$0xff]
  %v192 = vld [vmem:[%s2 + $0x18] sm:$0xff]
  %v193 = vld [vmem:[#allocation2] sm:$0xff]
  %vm194 = vcmask 261120
  %v196 = vsel %vm194, 0.0, 0
  %198 = vmatprep.subr.mxu0 0.0
  %199 = vmatpush1.msra.mxu0 %v189
  %200 = vmatprep.subr.mxu0 0.0
  %201 = vmatpush1.msra.mxu0 %v190
  %202 = vmatprep.subr.mxu0 0.0
  %203 = vmatpush1.msra.mxu0 %v191
  %204 = vmatprep.subr.mxu0 0.0
  %205 = vmatpush1.msra.mxu0 %v192
  %206 = vmatprep.subr.mxu0 0.0
  %207 = vmatpush1.msra.mxu0 0.0
  %208 = vmatprep.subr.mxu0 0.0
  %209 = vmatpush1.msra.mxu0 0.0
  %210 = vmatprep.subr.mxu0 0.0
  %211 = vmatpush1.msra.mxu0 0.0
  %212 = vmatprep.subr.mxu0 0.0
  %213 = vmatpush1.msra.mxu0 0.0
  %214 = vmatprep.subr.mxu0 0.0
  %215 = vmatpush1.msra.mxu0 0.0
  %216 = vmatprep.subr.mxu0 0.0
  %217 = vmatpush1.msra.mxu0 0.0
  %218 = vmatprep.subr.mxu0 0.0
  %219 = vmatpush1.msra.mxu0 0.0
  %220 = vmatprep.subr.mxu0 0.0
  %221 = vmatpush1.msra.mxu0 0.0
  %222 = vmatprep.subr.mxu0 0.0
  %223 = vmatpush1.msra.mxu0 0.0
  %224 = vmatprep.subr.mxu0 0.0
  %225 = vmatpush1.msra.mxu0 0.0
  %226 = vmatprep.subr.mxu0 0.0
  %227 = vmatpush1.msra.mxu0 0.0
  %228 = vmatprep.subr.mxu0 0.0
  %229 = vmatpush1.msra.mxu0 0.0
  %230 = vmatprep.subr.mxu0 0.0
  %231 = vmatpush1.msra.mxu0 0.0
  %232 = vmatprep.subr.mxu0 0.0
  %233 = vmatpush1.msra.mxu0 0.0
  %234 = vmatprep.subr.mxu0 0.0
  %235 = vmatpush1.msra.mxu0 0.0
  %236 = vmatprep.subr.mxu0 0.0
  %237 = vmatpush1.msra.mxu0 0.0
  %238 = vmatprep.subr.mxu0 0.0
  %239 = vmatpush1.msra.mxu0 0.0
  %240 = vmatprep.subr.mxu0 0.0
  %241 = vmatpush1.msra.mxu0 0.0
  %242 = vmatprep.subr.mxu0 0.0
  %243 = vmatpush1.msra.mxu0 0.0
  %244 = vmatprep.subr.mxu0 0.0
  %245 = vmatpush1.msra.mxu0 0.0
  %246 = vmatprep.subr.mxu0 0.0
  %247 = vmatpush1.msra.mxu0 0.0
  %248 = vmatprep.subr.mxu0 0.0
  %249 = vmatpush1.msra.mxu0 0.0
  %250 = vmatprep.subr.mxu0 0.0
  %251 = vmatpush1.msra.mxu0 0.0
  %252 = vmatprep.subr.mxu0 0.0
  %253 = vmatpush1.msra.mxu0 0.0
  %254 = vmatprep.subr.mxu0 0.0
  %255 = vmatpush1.msra.mxu0 0.0
  %256 = vmatprep.subr.mxu0 0.0
  %257 = vmatpush1.msra.mxu0 0.0
  %258 = vmatprep.subr.mxu0 0.0
  %259 = vmatpush1.msra.mxu0 0.0
  %260 = vmatprep.subr.mxu0 0.0
  %261 = vmatpush1.msra.mxu0 0.0
  %262 = vmatprep.mubr.f32.mxu0 0.0
  %263 = vmatmul.mubr.f32.gmra.mrb[0].mxu0 %v196
  %v264 = vpop.f32.mrb[0].mxu0
  %v265 = vadd.f32 0.0, %v264
  %v266 = vpop.f32.mrb[0].mxu0
  %267 = vdwg.mxu0
  %v268 = vadd.f32 %v193, %v265
  %v269 = vxor.u32 %v268, 2147483648
  %v270 = vmul.f32 %v269, 1.442695
  %v271 = vpow.pop %v270
  %v272 = vadd.f32 %v271, 1.0
  %v273 = vrcp.pop %v272
  %v274 = vmul.f32 1.0, %v273
  %v275 = vtanh.pop %v268
  %v276 = vmul.f32 %v274, 0.0
  %278 = vrot.lane.b32.xlu0 %v275, 64
  %v279 = vpop.permute.xlu0 %278
  %v281 = vmul.f32 %v274, %v279
  %283 = vrot.lane.b32.xlu0 %v281, 32
  %v284 = vpop.permute.xlu0 %283
  %v286 = vadd.f32 %v276, %v284
  %v287 = vtanh.pop %v286
  %289 = vrot.lane.b32.xlu0 %v287, 64
  %v290 = vpop.permute.xlu0 %289
  %v292 = vmul.f32 %v274, %v290
  %294 = vrot.lane.b32.xlu0 %v292, 32
  %v295 = vpop.permute.xlu0 %294
  %297 = vst.msk [vmem:[#allocation3] sm:$0xff] %vm194, %v295
  %v298 = vld [vmem:[#allocation2 + $0x8] sm:$0xff]
  %v299 = vsel %vm194, %v295, 0
  %301 = vmatprep.subr.mxu0 0.0
  %302 = vmatpush1.msra.mxu0 %v189
  %303 = vmatprep.subr.mxu0 0.0
  %304 = vmatpush1.msra.mxu0 %v190
  %305 = vmatprep.subr.mxu0 0.0
  %306 = vmatpush1.msra.mxu0 %v191
  %307 = vmatprep.subr.mxu0 0.0
  %308 = vmatpush1.msra.mxu0 %v192
  %309 = vmatprep.subr.mxu0 0.0
  %310 = vmatpush1.msra.mxu0 0.0
  %311 = vmatprep.subr.mxu0 0.0
  %312 = vmatpush1.msra.mxu0 0.0
  %313 = vmatprep.subr.mxu0 0.0
  %314 = vmatpush1.msra.mxu0 0.0
  %315 = vmatprep.subr.mxu0 0.0
  %316 = vmatpush1.msra.mxu0 0.0
  %317 = vmatprep.subr.mxu0 0.0
  %318 = vmatpush1.msra.mxu0 0.0
  %319 = vmatprep.subr.mxu0 0.0
  %320 = vmatpush1.msra.mxu0 0.0
  %321 = vmatprep.subr.mxu0 0.0
  %322 = vmatpush1.msra.mxu0 0.0
  %323 = vmatprep.subr.mxu0 0.0
  %324 = vmatpush1.msra.mxu0 0.0
  %325 = vmatprep.subr.mxu0 0.0
  %326 = vmatpush1.msra.mxu0 0.0
  %327 = vmatprep.subr.mxu0 0.0
  %328 = vmatpush1.msra.mxu0 0.0
  %329 = vmatprep.subr.mxu0 0.0
  %330 = vmatpush1.msra.mxu0 0.0
  %331 = vmatprep.subr.mxu0 0.0
  %332 = vmatpush1.msra.mxu0 0.0
  %333 = vmatprep.subr.mxu0 0.0
  %334 = vmatpush1.msra.mxu0 0.0
  %335 = vmatprep.subr.mxu0 0.0
  %336 = vmatpush1.msra.mxu0 0.0
  %337 = vmatprep.subr.mxu0 0.0
  %338 = vmatpush1.msra.mxu0 0.0
  %339 = vmatprep.subr.mxu0 0.0
  %340 = vmatpush1.msra.mxu0 0.0
  %341 = vmatprep.subr.mxu0 0.0
  %342 = vmatpush1.msra.mxu0 0.0
  %343 = vmatprep.subr.mxu0 0.0
  %344 = vmatpush1.msra.mxu0 0.0
  %345 = vmatprep.subr.mxu0 0.0
  %346 = vmatpush1.msra.mxu0 0.0
  %347 = vmatprep.subr.mxu0 0.0
  %348 = vmatpush1.msra.mxu0 0.0
  %349 = vmatprep.subr.mxu0 0.0
  %350 = vmatpush1.msra.mxu0 0.0
  %351 = vmatprep.subr.mxu0 0.0
  %352 = vmatpush1.msra.mxu0 0.0
  %353 = vmatprep.subr.mxu0 0.0
  %354 = vmatpush1.msra.mxu0 0.0
  %355 = vmatprep.subr.mxu0 0.0
  %356 = vmatpush1.msra.mxu0 0.0
  %357 = vmatprep.subr.mxu0 0.0
  %358 = vmatpush1.msra.mxu0 0.0
  %359 = vmatprep.subr.mxu0 0.0
  %360 = vmatpush1.msra.mxu0 0.0
  %361 = vmatprep.subr.mxu0 0.0
  %362 = vmatpush1.msra.mxu0 0.0
  %363 = vmatprep.subr.mxu0 0.0
  %364 = vmatpush1.msra.mxu0 0.0
  %365 = vmatprep.mubr.f32.mxu0 0.0
  %366 = vmatmul.mubr.f32.gmra.mrb[0].mxu0 %v299
  %v367 = vpop.f32.mrb[0].mxu0
  %v368 = vadd.f32 0.0, %v367
  %v369 = vpop.f32.mrb[0].mxu0
  %370 = vdwg.mxu0
  %v371 = vadd.f32 %v298, %v368
  %v372 = vxor.u32 %v371, 2147483648
  %v373 = vmul.f32 %v372, 1.442695
  %v374 = vpow.pop %v373
  %v375 = vadd.f32 %v374, 1.0
  %v376 = vrcp.pop %v375
  %v377 = vmul.f32 1.0, %v376
  %v378 = vtanh.pop %v371
  %v379 = vmul.f32 %v377, %v286
  %381 = vrot.lane.b32.xlu0 %v378, 64
  %v382 = vpop.permute.xlu0 %381
  %v384 = vmul.f32 %v377, %v382
  %386 = vrot.lane.b32.xlu0 %v384, 32
  %v387 = vpop.permute.xlu0 %386
  %v389 = vadd.f32 %v379, %v387
  %v390 = vtanh.pop %v389
  %392 = vrot.lane.b32.xlu0 %v390, 64
  %v393 = vpop.permute.xlu0 %392
  %v395 = vmul.f32 %v377, %v393
  %397 = vrot.lane.b32.xlu0 %v395, 32
  %v398 = vpop.permute.xlu0 %397
  %400 = vst.msk [vmem:[#allocation3 + $0x8] sm:$0xff] %vm194, %v398
  %v401 = vld [vmem:[#allocation2 + $0x10] sm:$0xff]
  %v402 = vsel %vm194, %v398, 0
  %404 = vmatprep.subr.mxu0 0.0
  %405 = vmatpush1.msra.mxu0 %v189
  %406 = vmatprep.subr.mxu0 0.0
  %407 = vmatpush1.msra.mxu0 %v190
  %408 = vmatprep.subr.mxu0 0.0
  %409 = vmatpush1.msra.mxu0 %v191
  %410 = vmatprep.subr.mxu0 0.0
  %411 = vmatpush1.msra.mxu0 %v192
  %412 = vmatprep.subr.mxu0 0.0
  %413 = vmatpush1.msra.mxu0 0.0
  %414 = vmatprep.subr.mxu0 0.0
  %415 = vmatpush1.msra.mxu0 0.0
  %416 = vmatprep.subr.mxu0 0.0
  %417 = vmatpush1.msra.mxu0 0.0
  %418 = vmatprep.subr.mxu0 0.0
  %419 = vmatpush1.msra.mxu0 0.0
  %420 = vmatprep.subr.mxu0 0.0
  %421 = vmatpush1.msra.mxu0 0.0
  %422 = vmatprep.subr.mxu0 0.0
  %423 = vmatpush1.msra.mxu0 0.0
  %424 = vmatprep.subr.mxu0 0.0
  %425 = vmatpush1.msra.mxu0 0.0
  %426 = vmatprep.subr.mxu0 0.0
  %427 = vmatpush1.msra.mxu0 0.0
  %428 = vmatprep.subr.mxu0 0.0
  %429 = vmatpush1.msra.mxu0 0.0
  %430 = vmatprep.subr.mxu0 0.0
  %431 = vmatpush1.msra.mxu0 0.0
  %432 = vmatprep.subr.mxu0 0.0
  %433 = vmatpush1.msra.mxu0 0.0
  %434 = vmatprep.subr.mxu0 0.0
  %435 = vmatpush1.msra.mxu0 0.0
  %436 = vmatprep.subr.mxu0 0.0
  %437 = vmatpush1.msra.mxu0 0.0
  %438 = vmatprep.subr.mxu0 0.0
  %439 = vmatpush1.msra.mxu0 0.0
  %440 = vmatprep.subr.mxu0 0.0
  %441 = vmatpush1.msra.mxu0 0.0
  %442 = vmatprep.subr.mxu0 0.0
  %443 = vmatpush1.msra.mxu0 0.0
  %444 = vmatprep.subr.mxu0 0.0
  %445 = vmatpush1.msra.mxu0 0.0
  %446 = vmatprep.subr.mxu0 0.0
  %447 = vmatpush1.msra.mxu0 0.0
  %448 = vmatprep.subr.mxu0 0.0
  %449 = vmatpush1.msra.mxu0 0.0
  %450 = vmatprep.subr.mxu0 0.0
  %451 = vmatpush1.msra.mxu0 0.0
  %452 = vmatprep.subr.mxu0 0.0
  %453 = vmatpush1.msra.mxu0 0.0
  %454 = vmatprep.subr.mxu0 0.0
  %455 = vmatpush1.msra.mxu0 0.0
  %456 = vmatprep.subr.mxu0 0.0
  %457 = vmatpush1.msra.mxu0 0.0
  %458 = vmatprep.subr.mxu0 0.0
  %459 = vmatpush1.msra.mxu0 0.0
  %460 = vmatprep.subr.mxu0 0.0
  %461 = vmatpush1.msra.mxu0 0.0
  %462 = vmatprep.subr.mxu0 0.0
  %463 = vmatpush1.msra.mxu0 0.0
  %464 = vmatprep.subr.mxu0 0.0
  %465 = vmatpush1.msra.mxu0 0.0
  %466 = vmatprep.subr.mxu0 0.0
  %467 = vmatpush1.msra.mxu0 0.0
  %468 = vmatprep.mubr.f32.mxu0 0.0
  %469 = vmatmul.mubr.f32.gmra.mrb[0].mxu0 %v402
  %v470 = vpop.f32.mrb[0].mxu0
  %v471 = vadd.f32 0.0, %v470
  %v472 = vpop.f32.mrb[0].mxu0
  %473 = vdwg.mxu0
  %v474 = vadd.f32 %v401, %v471
  %v475 = vxor.u32 %v474, 2147483648
  %v476 = vmul.f32 %v475, 1.442695
  %v477 = vpow.pop %v476
  %v478 = vadd.f32 %v477, 1.0
  %v479 = vrcp.pop %v478
  %v480 = vmul.f32 1.0, %v479
  %v481 = vtanh.pop %v474
  %v482 = vmul.f32 %v480, %v389
  %484 = vrot.lane.b32.xlu0 %v481, 64
  %v485 = vpop.permute.xlu0 %484
  %v487 = vmul.f32 %v480, %v485
  %489 = vrot.lane.b32.xlu0 %v487, 32
  %v490 = vpop.permute.xlu0 %489
  %v492 = vadd.f32 %v482, %v490
  %v493 = vtanh.pop %v492
  %495 = vrot.lane.b32.xlu0 %v493, 64
  %v496 = vpop.permute.xlu0 %495
  %v498 = vmul.f32 %v480, %v496
  %500 = vrot.lane.b32.xlu0 %v498, 32
  %v501 = vpop.permute.xlu0 %500
  %503 = vst.msk [vmem:[#allocation3 + $0x10] sm:$0xff] %vm194, %v501
  %v504 = vld [vmem:[#allocation2 + $0x18] sm:$0xff]
  %v505 = vsel %vm194, %v501, 0
  %507 = vmatprep.subr.mxu0 0.0
  %508 = vmatpush1.msra.mxu0 %v189
  %509 = vmatprep.subr.mxu0 0.0
  %510 = vmatpush1.msra.mxu0 %v190
  %511 = vmatprep.subr.mxu0 0.0
  %512 = vmatpush1.msra.mxu0 %v191
  %513 = vmatprep.subr.mxu0 0.0
  %514 = vmatpush1.msra.mxu0 %v192
  %515 = vmatprep.subr.mxu0 0.0
  %516 = vmatpush1.msra.mxu0 0.0
  %517 = vmatprep.subr.mxu0 0.0
  %518 = vmatpush1.msra.mxu0 0.0
  %519 = vmatprep.subr.mxu0 0.0
  %520 = vmatpush1.msra.mxu0 0.0
  %521 = vmatprep.subr.mxu0 0.0
  %522 = vmatpush1.msra.mxu0 0.0
  %523 = vmatprep.subr.mxu0 0.0
  %524 = vmatpush1.msra.mxu0 0.0
  %525 = vmatprep.subr.mxu0 0.0
  %526 = vmatpush1.msra.mxu0 0.0
  %527 = vmatprep.subr.mxu0 0.0
  %528 = vmatpush1.msra.mxu0 0.0
  %529 = vmatprep.subr.mxu0 0.0
  %530 = vmatpush1.msra.mxu0 0.0
  %531 = vmatprep.subr.mxu0 0.0
  %532 = vmatpush1.msra.mxu0 0.0
  %533 = vmatprep.subr.mxu0 0.0
  %534 = vmatpush1.msra.mxu0 0.0
  %535 = vmatprep.subr.mxu0 0.0
  %536 = vmatpush1.msra.mxu0 0.0
  %537 = vmatprep.subr.mxu0 0.0
  %538 = vmatpush1.msra.mxu0 0.0
  %539 = vmatprep.subr.mxu0 0.0
  %540 = vmatpush1.msra.mxu0 0.0
  %541 = vmatprep.subr.mxu0 0.0
  %542 = vmatpush1.msra.mxu0 0.0
  %543 = vmatprep.subr.mxu0 0.0
  %544 = vmatpush1.msra.mxu0 0.0
  %545 = vmatprep.subr.mxu0 0.0
  %546 = vmatpush1.msra.mxu0 0.0
  %547 = vmatprep.subr.mxu0 0.0
  %548 = vmatpush1.msra.mxu0 0.0
  %549 = vmatprep.subr.mxu0 0.0
  %550 = vmatpush1.msra.mxu0 0.0
  %551 = vmatprep.subr.mxu0 0.0
  %552 = vmatpush1.msra.mxu0 0.0
  %553 = vmatprep.subr.mxu0 0.0
  %554 = vmatpush1.msra.mxu0 0.0
  %555 = vmatprep.subr.mxu0 0.0
  %556 = vmatpush1.msra.mxu0 0.0
  %557 = vmatprep.subr.mxu0 0.0
  %558 = vmatpush1.msra.mxu0 0.0
  %559 = vmatprep.subr.mxu0 0.0
  %560 = vmatpush1.msra.mxu0 0.0
  %561 = vmatprep.subr.mxu0 0.0
  %562 = vmatpush1.msra.mxu0 0.0
  %563 = vmatprep.subr.mxu0 0.0
  %564 = vmatpush1.msra.mxu0 0.0
  %565 = vmatprep.subr.mxu0 0.0
  %566 = vmatpush1.msra.mxu0 0.0
  %567 = vmatprep.subr.mxu0 0.0
  %568 = vmatpush1.msra.mxu0 0.0
  %569 = vmatprep.subr.mxu0 0.0
  %570 = vmatpush1.msra.mxu0 0.0
  %571 = vmatprep.mubr.f32.mxu0 0.0
  %572 = vmatmul.mubr.f32.gmra.mrb[0].mxu0 %v505
  %v573 = vpop.f32.mrb[0].mxu0
  %v574 = vadd.f32 0.0, %v573
  %v575 = vpop.f32.mrb[0].mxu0
  %576 = vdwg.mxu0
  %v577 = vadd.f32 %v504, %v574
  %v578 = vxor.u32 %v577, 2147483648
  %v579 = vmul.f32 %v578, 1.442695
  %v580 = vpow.pop %v579
  %v581 = vadd.f32 %v580, 1.0
  %v582 = vrcp.pop %v581
  %v583 = vmul.f32 1.0, %v582
  %v584 = vtanh.pop %v577
  %v585 = vmul.f32 %v583, %v492
  %587 = vrot.lane.b32.xlu0 %v584, 64
  %v588 = vpop.permute.xlu0 %587
  %v590 = vmul.f32 %v583, %v588
  %592 = vrot.lane.b32.xlu0 %v590, 32
  %v593 = vpop.permute.xlu0 %592
  %v595 = vadd.f32 %v585, %v593
  %v596 = vtanh.pop %v595
  %598 = vrot.lane.b32.xlu0 %v596, 64
  %v599 = vpop.permute.xlu0 %598
  %v601 = vmul.f32 %v583, %v599
  %603 = vrot.lane.b32.xlu0 %v601, 32
  %v604 = vpop.permute.xlu0 %603
  %606 = vst.msk [vmem:[#allocation3 + $0x18] sm:$0xff] %vm194, %v604
  %v607 = vld [vmem:[#allocation2 + $0x20] sm:$0xff]
  %v608 = vsel %vm194, %v604, 0
  %610 = vmatprep.subr.mxu0 0.0
  %611 = vmatpush1.msra.mxu0 %v189
  %612 = vmatprep.subr.mxu0 0.0
  %613 = vmatpush1.msra.mxu0 %v190
  %614 = vmatprep.subr.mxu0 0.0
  %615 = vmatpush1.msra.mxu0 %v191
  %616 = vmatprep.subr.mxu0 0.0
  %617 = vmatpush1.msra.mxu0 %v192
  %618 = vmatprep.subr.mxu0 0.0
  %619 = vmatpush1.msra.mxu0 0.0
  %620 = vmatprep.subr.mxu0 0.0
  %621 = vmatpush1.msra.mxu0 0.0
  %622 = vmatprep.subr.mxu0 0.0
  %623 = vmatpush1.msra.mxu0 0.0
  %624 = vmatprep.subr.mxu0 0.0
  %625 = vmatpush1.msra.mxu0 0.0
  %626 = vmatprep.subr.mxu0 0.0
  %627 = vmatpush1.msra.mxu0 0.0
  %628 = vmatprep.subr.mxu0 0.0
  %629 = vmatpush1.msra.mxu0 0.0
  %630 = vmatprep.subr.mxu0 0.0
  %631 = vmatpush1.msra.mxu0 0.0
  %632 = vmatprep.subr.mxu0 0.0
  %633 = vmatpush1.msra.mxu0 0.0
  %634 = vmatprep.subr.mxu0 0.0
  %635 = vmatpush1.msra.mxu0 0.0
  %636 = vmatprep.subr.mxu0 0.0
  %637 = vmatpush1.msra.mxu0 0.0
  %638 = vmatprep.subr.mxu0 0.0
  %639 = vmatpush1.msra.mxu0 0.0
  %640 = vmatprep.subr.mxu0 0.0
  %641 = vmatpush1.msra.mxu0 0.0
  %642 = vmatprep.subr.mxu0 0.0
  %643 = vmatpush1.msra.mxu0 0.0
  %644 = vmatprep.subr.mxu0 0.0
  %645 = vmatpush1.msra.mxu0 0.0
  %646 = vmatprep.subr.mxu0 0.0
  %647 = vmatpush1.msra.mxu0 0.0
  %648 = vmatprep.subr.mxu0 0.0
  %649 = vmatpush1.msra.mxu0 0.0
  %650 = vmatprep.subr.mxu0 0.0
  %651 = vmatpush1.msra.mxu0 0.0
  %652 = vmatprep.subr.mxu0 0.0
  %653 = vmatpush1.msra.mxu0 0.0
  %654 = vmatprep.subr.mxu0 0.0
  %655 = vmatpush1.msra.mxu0 0.0
  %656 = vmatprep.subr.mxu0 0.0
  %657 = vmatpush1.msra.mxu0 0.0
  %658 = vmatprep.subr.mxu0 0.0
  %659 = vmatpush1.msra.mxu0 0.0
  %660 = vmatprep.subr.mxu0 0.0
  %661 = vmatpush1.msra.mxu0 0.0
  %662 = vmatprep.subr.mxu0 0.0
  %663 = vmatpush1.msra.mxu0 0.0
  %664 = vmatprep.subr.mxu0 0.0
  %665 = vmatpush1.msra.mxu0 0.0
  %666 = vmatprep.subr.mxu0 0.0
  %667 = vmatpush1.msra.mxu0 0.0
  %668 = vmatprep.subr.mxu0 0.0
  %669 = vmatpush1.msra.mxu0 0.0
  %670 = vmatprep.subr.mxu0 0.0
  %671 = vmatpush1.msra.mxu0 0.0
  %672 = vmatprep.subr.mxu0 0.0
  %673 = vmatpush1.msra.mxu0 0.0
  %674 = vmatprep.mubr.f32.mxu0 0.0
  %675 = vmatmul.mubr.f32.gmra.mrb[0].mxu0 %v608
  %v676 = vpop.f32.mrb[0].mxu0
  %v677 = vadd.f32 0.0, %v676
  %v678 = vpop.f32.mrb[0].mxu0
  %679 = vdwg.mxu0
  %v680 = vadd.f32 %v607, %v677
  %v681 = vxor.u32 %v680, 2147483648
  %v682 = vmul.f32 %v681, 1.442695
  %v683 = vpow.pop %v682
  %v684 = vadd.f32 %v683, 1.0
  %v685 = vrcp.pop %v684
  %v686 = vmul.f32 1.0, %v685
  %v687 = vtanh.pop %v680
  %v688 = vmul.f32 %v686, %v595
  %690 = vrot.lane.b32.xlu0 %v687, 64
  %v691 = vpop.permute.xlu0 %690
  %v693 = vmul.f32 %v686, %v691
  %695 = vrot.lane.b32.xlu0 %v693, 32
  %v696 = vpop.permute.xlu0 %695
  %v698 = vadd.f32 %v688, %v696
  %v699 = vtanh.pop %v698
  %701 = vrot.lane.b32.xlu0 %v699, 64
  %v702 = vpop.permute.xlu0 %701
  %v704 = vmul.f32 %v686, %v702
  %706 = vrot.lane.b32.xlu0 %v704, 32
  %v707 = vpop.permute.xlu0 %706
  %709 = vst.msk [vmem:[#allocation3 + $0x20] sm:$0xff] %vm194, %v707
  %v710 = vld [vmem:[#allocation2 + $0x28] sm:$0xff]
  %v711 = vsel %vm194, %v707, 0
  %713 = vmatprep.subr.mxu0 0.0
  %714 = vmatpush1.msra.mxu0 %v189
  %715 = vmatprep.subr.mxu0 0.0
  %716 = vmatpush1.msra.mxu0 %v190
  %717 = vmatprep.subr.mxu0 0.0
  %718 = vmatpush1.msra.mxu0 %v191
  %719 = vmatprep.subr.mxu0 0.0
  %720 = vmatpush1.msra.mxu0 %v192
  %721 = vmatprep.subr.mxu0 0.0
  %722 = vmatpush1.msra.mxu0 0.0
  %723 = vmatprep.subr.mxu0 0.0
  %724 = vmatpush1.msra.mxu0 0.0
  %725 = vmatprep.subr.mxu0 0.0
  %726 = vmatpush1.msra.mxu0 0.0
  %727 = vmatprep.subr.mxu0 0.0
  %728 = vmatpush1.msra.mxu0 0.0
  %729 = vmatprep.subr.mxu0 0.0
  %730 = vmatpush1.msra.mxu0 0.0
  %731 = vmatprep.subr.mxu0 0.0
  %732 = vmatpush1.msra.mxu0 0.0
  %733 = vmatprep.subr.mxu0 0.0
  %734 = vmatpush1.msra.mxu0 0.0
  %735 = vmatprep.subr.mxu0 0.0
  %736 = vmatpush1.msra.mxu0 0.0
  %737 = vmatprep.subr.mxu0 0.0
  %738 = vmatpush1.msra.mxu0 0.0
  %739 = vmatprep.subr.mxu0 0.0
  %740 = vmatpush1.msra.mxu0 0.0
  %741 = vmatprep.subr.mxu0 0.0
  %742 = vmatpush1.msra.mxu0 0.0
  %743 = vmatprep.subr.mxu0 0.0
  %744 = vmatpush1.msra.mxu0 0.0
  %745 = vmatprep.subr.mxu0 0.0
  %746 = vmatpush1.msra.mxu0 0.0
  %747 = vmatprep.subr.mxu0 0.0
  %748 = vmatpush1.msra.mxu0 0.0
  %749 = vmatprep.subr.mxu0 0.0
  %750 = vmatpush1.msra.mxu0 0.0
  %751 = vmatprep.subr.mxu0 0.0
  %752 = vmatpush1.msra.mxu0 0.0
  %753 = vmatprep.subr.mxu0 0.0
  %754 = vmatpush1.msra.mxu0 0.0
  %755 = vmatprep.subr.mxu0 0.0
  %756 = vmatpush1.msra.mxu0 0.0
  %757 = vmatprep.subr.mxu0 0.0
  %758 = vmatpush1.msra.mxu0 0.0
  %759 = vmatprep.subr.mxu0 0.0
  %760 = vmatpush1.msra.mxu0 0.0
  %761 = vmatprep.subr.mxu0 0.0
  %762 = vmatpush1.msra.mxu0 0.0
  %763 = vmatprep.subr.mxu0 0.0
  %764 = vmatpush1.msra.mxu0 0.0
  %765 = vmatprep.subr.mxu0 0.0
  %766 = vmatpush1.msra.mxu0 0.0
  %767 = vmatprep.subr.mxu0 0.0
  %768 = vmatpush1.msra.mxu0 0.0
  %769 = vmatprep.subr.mxu0 0.0
  %770 = vmatpush1.msra.mxu0 0.0
  %771 = vmatprep.subr.mxu0 0.0
  %772 = vmatpush1.msra.mxu0 0.0
  %773 = vmatprep.subr.mxu0 0.0
  %774 = vmatpush1.msra.mxu0 0.0
  %775 = vmatprep.subr.mxu0 0.0
  %776 = vmatpush1.msra.mxu0 0.0
  %777 = vmatprep.mubr.f32.mxu0 0.0
  %778 = vmatmul.mubr.f32.gmra.mrb[0].mxu0 %v711
  %v779 = vpop.f32.mrb[0].mxu0
  %v780 = vadd.f32 0.0, %v779
  %v781 = vpop.f32.mrb[0].mxu0
  %782 = vdwg.mxu0
  %v783 = vadd.f32 %v710, %v780
  %v784 = vxor.u32 %v783, 2147483648
  %v785 = vmul.f32 %v784, 1.442695
  %v786 = vpow.pop %v785
  %v787 = vadd.f32 %v786, 1.0
  %v788 = vrcp.pop %v787
  %v789 = vmul.f32 1.0, %v788
  %v790 = vtanh.pop %v783
  %v791 = vmul.f32 %v789, %v698
  %793 = vrot.lane.b32.xlu0 %v790, 64
  %v794 = vpop.permute.xlu0 %793
  %v796 = vmul.f32 %v789, %v794
  %798 = vrot.lane.b32.xlu0 %v796, 32
  %v799 = vpop.permute.xlu0 %798
  %v801 = vadd.f32 %v791, %v799
  %v802 = vtanh.pop %v801
  %804 = vrot.lane.b32.xlu0 %v802, 64
  %v805 = vpop.permute.xlu0 %804
  %v807 = vmul.f32 %v789, %v805
  %809 = vrot.lane.b32.xlu0 %v807, 32
  %v810 = vpop.permute.xlu0 %809
  %812 = vst.msk [vmem:[#allocation3 + $0x28] sm:$0xff] %vm194, %v810
  %v813 = vld [vmem:[#allocation2 + $0x30] sm:$0xff]
  %v814 = vsel %vm194, %v810, 0
  %816 = vmatprep.subr.mxu0 0.0
  %817 = vmatpush1.msra.mxu0 %v189
  %818 = vmatprep.subr.mxu0 0.0
  %819 = vmatpush1.msra.mxu0 %v190
  %820 = vmatprep.subr.mxu0 0.0
  %821 = vmatpush1.msra.mxu0 %v191
  %822 = vmatprep.subr.mxu0 0.0
  %823 = vmatpush1.msra.mxu0 %v192
  %824 = vmatprep.subr.mxu0 0.0
  %825 = vmatpush1.msra.mxu0 0.0
  %826 = vmatprep.subr.mxu0 0.0
  %827 = vmatpush1.msra.mxu0 0.0
  %828 = vmatprep.subr.mxu0 0.0
  %829 = vmatpush1.msra.mxu0 0.0
  %830 = vmatprep.subr.mxu0 0.0
  %831 = vmatpush1.msra.mxu0 0.0
  %832 = vmatprep.subr.mxu0 0.0
  %833 = vmatpush1.msra.mxu0 0.0
  %834 = vmatprep.subr.mxu0 0.0
  %835 = vmatpush1.msra.mxu0 0.0
  %836 = vmatprep.subr.mxu0 0.0
  %837 = vmatpush1.msra.mxu0 0.0
  %838 = vmatprep.subr.mxu0 0.0
  %839 = vmatpush1.msra.mxu0 0.0
  %840 = vmatprep.subr.mxu0 0.0
  %841 = vmatpush1.msra.mxu0 0.0
  %842 = vmatprep.subr.mxu0 0.0
  %843 = vmatpush1.msra.mxu0 0.0
  %844 = vmatprep.subr.mxu0 0.0
  %845 = vmatpush1.msra.mxu0 0.0
  %846 = vmatprep.subr.mxu0 0.0
  %847 = vmatpush1.msra.mxu0 0.0
  %848 = vmatprep.subr.mxu0 0.0
  %849 = vmatpush1.msra.mxu0 0.0
  %850 = vmatprep.subr.mxu0 0.0
  %851 = vmatpush1.msra.mxu0 0.0
  %852 = vmatprep.subr.mxu0 0.0
  %853 = vmatpush1.msra.mxu0 0.0
  %854 = vmatprep.subr.mxu0 0.0
  %855 = vmatpush1.msra.mxu0 0.0
  %856 = vmatprep.subr.mxu0 0.0
  %857 = vmatpush1.msra.mxu0 0.0
  %858 = vmatprep.subr.mxu0 0.0
  %859 = vmatpush1.msra.mxu0 0.0
  %860 = vmatprep.subr.mxu0 0.0
  %861 = vmatpush1.msra.mxu0 0.0
  %862 = vmatprep.subr.mxu0 0.0
  %863 = vmatpush1.msra.mxu0 0.0
  %864 = vmatprep.subr.mxu0 0.0
  %865 = vmatpush1.msra.mxu0 0.0
  %866 = vmatprep.subr.mxu0 0.0
  %867 = vmatpush1.msra.mxu0 0.0
  %868 = vmatprep.subr.mxu0 0.0
  %869 = vmatpush1.msra.mxu0 0.0
  %870 = vmatprep.subr.mxu0 0.0
  %871 = vmatpush1.msra.mxu0 0.0
  %872 = vmatprep.subr.mxu0 0.0
  %873 = vmatpush1.msra.mxu0 0.0
  %874 = vmatprep.subr.mxu0 0.0
  %875 = vmatpush1.msra.mxu0 0.0
  %876 = vmatprep.subr.mxu0 0.0
  %877 = vmatpush1.msra.mxu0 0.0
  %878 = vmatprep.subr.mxu0 0.0
  %879 = vmatpush1.msra.mxu0 0.0
  %880 = vmatprep.mubr.f32.mxu0 0.0
  %881 = vmatmul.mubr.f32.gmra.mrb[0].mxu0 %v814
  %v882 = vpop.f32.mrb[0].mxu0
  %v883 = vadd.f32 0.0, %v882
  %v884 = vpop.f32.mrb[0].mxu0
  %885 = vdwg.mxu0
  %v886 = vadd.f32 %v813, %v883
  %v887 = vxor.u32 %v886, 2147483648
  %v888 = vmul.f32 %v887, 1.442695
  %v889 = vpow.pop %v888
  %v890 = vadd.f32 %v889, 1.0
  %v891 = vrcp.pop %v890
  %v892 = vmul.f32 1.0, %v891
  %v893 = vtanh.pop %v886
  %v894 = vmul.f32 %v892, %v801
  %896 = vrot.lane.b32.xlu0 %v893, 64
  %v897 = vpop.permute.xlu0 %896
  %v899 = vmul.f32 %v892, %v897
  %901 = vrot.lane.b32.xlu0 %v899, 32
  %v902 = vpop.permute.xlu0 %901
  %v904 = vadd.f32 %v894, %v902
  %v905 = vtanh.pop %v904
  %907 = vrot.lane.b32.xlu0 %v905, 64
  %v908 = vpop.permute.xlu0 %907
  %v910 = vmul.f32 %v892, %v908
  %912 = vrot.lane.b32.xlu0 %v910, 32
  %v913 = vpop.permute.xlu0 %912
  %915 = vst.msk [vmem:[#allocation3 + $0x30] sm:$0xff] %vm194, %v913
  %v916 = vld [vmem:[#allocation2 + $0x38] sm:$0xff]
  %v917 = vsel %vm194, %v913, 0
  %919 = vmatprep.subr.mxu0 0.0
  %920 = vmatpush1.msra.mxu0 %v189
  %921 = vmatprep.subr.mxu0 0.0
  %922 = vmatpush1.msra.mxu0 %v190
  %923 = vmatprep.subr.mxu0 0.0
  %924 = vmatpush1.msra.mxu0 %v191
  %925 = vmatprep.subr.mxu0 0.0
  %926 = vmatpush1.msra.mxu0 %v192
  %927 = vmatprep.subr.mxu0 0.0
  %928 = vmatpush1.msra.mxu0 0.0
  %929 = vmatprep.subr.mxu0 0.0
  %930 = vmatpush1.msra.mxu0 0.0
  %931 = vmatprep.subr.mxu0 0.0
  %932 = vmatpush1.msra.mxu0 0.0
  %933 = vmatprep.subr.mxu0 0.0
  %934 = vmatpush1.msra.mxu0 0.0
  %935 = vmatprep.subr.mxu0 0.0
  %936 = vmatpush1.msra.mxu0 0.0
  %937 = vmatprep.subr.mxu0 0.0
  %938 = vmatpush1.msra.mxu0 0.0
  %939 = vmatprep.subr.mxu0 0.0
  %940 = vmatpush1.msra.mxu0 0.0
  %941 = vmatprep.subr.mxu0 0.0
  %942 = vmatpush1.msra.mxu0 0.0
  %943 = vmatprep.subr.mxu0 0.0
  %944 = vmatpush1.msra.mxu0 0.0
  %945 = vmatprep.subr.mxu0 0.0
  %946 = vmatpush1.msra.mxu0 0.0
  %947 = vmatprep.subr.mxu0 0.0
  %948 = vmatpush1.msra.mxu0 0.0
  %949 = vmatprep.subr.mxu0 0.0
  %950 = vmatpush1.msra.mxu0 0.0
  %951 = vmatprep.subr.mxu0 0.0
  %952 = vmatpush1.msra.mxu0 0.0
  %953 = vmatprep.subr.mxu0 0.0
  %954 = vmatpush1.msra.mxu0 0.0
  %955 = vmatprep.subr.mxu0 0.0
  %956 = vmatpush1.msra.mxu0 0.0
  %957 = vmatprep.subr.mxu0 0.0
  %958 = vmatpush1.msra.mxu0 0.0
  %959 = vmatprep.subr.mxu0 0.0
  %960 = vmatpush1.msra.mxu0 0.0
  %961 = vmatprep.subr.mxu0 0.0
  %962 = vmatpush1.msra.mxu0 0.0
  %963 = vmatprep.subr.mxu0 0.0
  %964 = vmatpush1.msra.mxu0 0.0
  %965 = vmatprep.subr.mxu0 0.0
  %966 = vmatpush1.msra.mxu0 0.0
  %967 = vmatprep.subr.mxu0 0.0
  %968 = vmatpush1.msra.mxu0 0.0
  %969 = vmatprep.subr.mxu0 0.0
  %970 = vmatpush1.msra.mxu0 0.0
  %971 = vmatprep.subr.mxu0 0.0
  %972 = vmatpush1.msra.mxu0 0.0
  %973 = vmatprep.subr.mxu0 0.0
  %974 = vmatpush1.msra.mxu0 0.0
  %975 = vmatprep.subr.mxu0 0.0
  %976 = vmatpush1.msra.mxu0 0.0
  %977 = vmatprep.subr.mxu0 0.0
  %978 = vmatpush1.msra.mxu0 0.0
  %979 = vmatprep.subr.mxu0 0.0
  %980 = vmatpush1.msra.mxu0 0.0
  %981 = vmatprep.subr.mxu0 0.0
  %982 = vmatpush1.msra.mxu0 0.0
  %983 = vmatprep.mubr.f32.mxu0 0.0
  %984 = vmatmul.mubr.f32.gmra.mrb[0].mxu0 %v917
  %v985 = vpop.f32.mrb[0].mxu0
  %v986 = vadd.f32 0.0, %v985
  %v987 = vpop.f32.mrb[0].mxu0
  %988 = vdwg.mxu0
  %v989 = vadd.f32 %v916, %v986
  %v990 = vxor.u32 %v989, 2147483648
  %v991 = vmul.f32 %v990, 1.442695
  %v992 = vpow.pop %v991
  %v993 = vadd.f32 %v992, 1.0
  %v994 = vrcp.pop %v993
  %v995 = vmul.f32 1.0, %v994
  %v996 = vtanh.pop %v989
  %v997 = vmul.f32 %v995, %v904
  %999 = vrot.lane.b32.xlu0 %v996, 64
  %v1000 = vpop.permute.xlu0 %999
  %v1002 = vmul.f32 %v995, %v1000
  %1004 = vrot.lane.b32.xlu0 %v1002, 32
  %v1005 = vpop.permute.xlu0 %1004
  %v1007 = vadd.f32 %v997, %v1005
  %v1008 = vtanh.pop %v1007
  %1010 = vrot.lane.b32.xlu0 %v1008, 64
  %v1011 = vpop.permute.xlu0 %1010
  %v1013 = vmul.f32 %v995, %v1011
  %1015 = vrot.lane.b32.xlu0 %v1013, 32
  %v1016 = vpop.permute.xlu0 %1015
  %1018 = vst.msk [vmem:[#allocation3 + $0x38] sm:$0xff] %vm194, %v1016
  %v1019 = vld [vmem:[#allocation3] sm:$0xff]
  %v1020 = vld [vmem:[#allocation3 + $0x8] sm:$0xff]
  %v1021 = vld [vmem:[#allocation3 + $0x10] sm:$0xff]
  %v1022 = vld [vmem:[#allocation3 + $0x18] sm:$0xff]
  %v1023 = vld [vmem:[#allocation3 + $0x20] sm:$0xff]
  %v1024 = vld [vmem:[#allocation3 + $0x28] sm:$0xff]
  %v1025 = vld [vmem:[#allocation3 + $0x30] sm:$0xff]
  %v1026 = vld [vmem:[#allocation3 + $0x38] sm:$0xff]
  %v1027 = vld [vmem:[%s4] sm:$0xff]
  %v1028 = vld [vmem:[%s4 + $0x8] sm:$0xff]
  %v1029 = vld [vmem:[%s4 + $0x10] sm:$0xff]
  %v1030 = vld [vmem:[%s4 + $0x18] sm:$0xff]
  %v1031 = vld [vmem:[%s6] sm:$0x1]
  %v1033 = vlaneseq
  %v1034 = vshrl.u32 %v1033, 7
  %v1035 = vsub.s32 0, %v1034
  %v1036 = vrot.slane %v1031, %v1035
  %v1039 = vsel %vm194, %v1019, 0
  %v1042 = vsel %vm194, %v1020, 0
  %v1045 = vsel %vm194, %v1021, 0
  %v1048 = vsel %vm194, %v1022, 0
  %v1051 = vsel %vm194, %v1023, 0
  %v1054 = vsel %vm194, %v1024, 0
  %v1057 = vsel %vm194, %v1025, 0
  %v1060 = vsel %vm194, %v1026, 0
  %1062 = vmatprep.subr.mxu0 0.0
  %1063 = vmatpush1.msra.mxu0 %v1027
  %1064 = vmatprep.subr.mxu0 0.0
  %1065 = vmatpush1.msra.mxu0 %v1028
  %1066 = vmatprep.subr.mxu0 0.0
  %1067 = vmatpush1.msra.mxu0 %v1029
  %1068 = vmatprep.subr.mxu0 0.0
  %1069 = vmatpush1.msra.mxu0 %v1030
  %1070 = vmatprep.subr.mxu0 0.0
  %1071 = vmatpush1.msra.mxu0 0.0
  %1072 = vmatprep.subr.mxu0 0.0
  %1073 = vmatpush1.msra.mxu0 0.0
  %1074 = vmatprep.subr.mxu0 0.0
  %1075 = vmatpush1.msra.mxu0 0.0
  %1076 = vmatprep.subr.mxu0 0.0
  %1077 = vmatpush1.msra.mxu0 0.0
  %1078 = vmatprep.subr.mxu0 0.0
  %1079 = vmatpush1.msra.mxu0 0.0
  %1080 = vmatprep.subr.mxu0 0.0
  %1081 = vmatpush1.msra.mxu0 0.0
  %1082 = vmatprep.subr.mxu0 0.0
  %1083 = vmatpush1.msra.mxu0 0.0
  %1084 = vmatprep.subr.mxu0 0.0
  %1085 = vmatpush1.msra.mxu0 0.0
  %1086 = vmatprep.subr.mxu0 0.0
  %1087 = vmatpush1.msra.mxu0 0.0
  %1088 = vmatprep.subr.mxu0 0.0
  %1089 = vmatpush1.msra.mxu0 0.0
  %1090 = vmatprep.subr.mxu0 0.0
  %1091 = vmatpush1.msra.mxu0 0.0
  %1092 = vmatprep.subr.mxu0 0.0
  %1093 = vmatpush1.msra.mxu0 0.0
  %1094 = vmatprep.subr.mxu0 0.0
  %1095 = vmatpush1.msra.mxu0 0.0
  %1096 = vmatprep.subr.mxu0 0.0
  %1097 = vmatpush1.msra.mxu0 0.0
  %1098 = vmatprep.subr.mxu0 0.0
  %1099 = vmatpush1.msra.mxu0 0.0
  %1100 = vmatprep.subr.mxu0 0.0
  %1101 = vmatpush1.msra.mxu0 0.0
  %1102 = vmatprep.subr.mxu0 0.0
  %1103 = vmatpush1.msra.mxu0 0.0
  %1104 = vmatprep.subr.mxu0 0.0
  %1105 = vmatpush1.msra.mxu0 0.0
  %1106 = vmatprep.subr.mxu0 0.0
  %1107 = vmatpush1.msra.mxu0 0.0
  %1108 = vmatprep.subr.mxu0 0.0
  %1109 = vmatpush1.msra.mxu0 0.0
  %1110 = vmatprep.subr.mxu0 0.0
  %1111 = vmatpush1.msra.mxu0 0.0
  %1112 = vmatprep.subr.mxu0 0.0
  %1113 = vmatpush1.msra.mxu0 0.0
  %1114 = vmatprep.subr.mxu0 0.0
  %1115 = vmatpush1.msra.mxu0 0.0
  %1116 = vmatprep.subr.mxu0 0.0
  %1117 = vmatpush1.msra.mxu0 0.0
  %1118 = vmatprep.subr.mxu0 0.0
  %1119 = vmatpush1.msra.mxu0 0.0
  %1120 = vmatprep.subr.mxu0 0.0
  %1121 = vmatpush1.msra.mxu0 0.0
  %1122 = vmatprep.subr.mxu0 0.0
  %1123 = vmatpush1.msra.mxu0 0.0
  %1124 = vmatprep.subr.mxu0 0.0
  %1125 = vmatpush1.msra.mxu0 0.0
  %1126 = vmatprep.mubr.f32.mxu0 0.0
  %1127 = vmatmul.mubr.f32.gmra.mrb[0].mxu0 %v1039
  %v1128 = vpop.f32.mrb[0].mxu0
  %v1129 = vadd.f32 %v1036, %v1128
  %v1130 = vpop.f32.mrb[0].mxu0
  %1131 = vmatprep.mubr.f32.mxu0 0.0
  %1132 = vmatmul.mubr.f32.gmra.mrb[0].mxu0 %v1042
  %v1133 = vpop.f32.mrb[0].mxu0
  %v1134 = vadd.f32 %v1036, %v1133
  %v1135 = vpop.f32.mrb[0].mxu0
  %1136 = vmatprep.mubr.f32.mxu0 0.0
  %1137 = vmatmul.mubr.f32.gmra.mrb[0].mxu0 %v1045
  %v1138 = vpop.f32.mrb[0].mxu0
  %v1139 = vadd.f32 %v1036, %v1138
  %v1140 = vpop.f32.mrb[0].mxu0
  %1141 = vmatprep.mubr.f32.mxu0 0.0
  %1142 = vmatmul.mubr.f32.gmra.mrb[0].mxu0 %v1048
  %v1143 = vpop.f32.mrb[0].mxu0
  %v1144 = vadd.f32 %v1036, %v1143
  %v1145 = vpop.f32.mrb[0].mxu0
  %1146 = vmatprep.mubr.f32.mxu0 0.0
  %1147 = vmatmul.mubr.f32.gmra.mrb[0].mxu0 %v1051
  %v1148 = vpop.f32.mrb[0].mxu0
  %v1149 = vadd.f32 %v1036, %v1148
  %v1150 = vpop.f32.mrb[0].mxu0
  %1151 = vmatprep.mubr.f32.mxu0 0.0
  %1152 = vmatmul.mubr.f32.gmra.mrb[0].mxu0 %v1054
  %v1153 = vpop.f32.mrb[0].mxu0
  %v1154 = vadd.f32 %v1036, %v1153
  %v1155 = vpop.f32.mrb[0].mxu0
  %1156 = vmatprep.mubr.f32.mxu0 0.0
  %1157 = vmatmul.mubr.f32.gmra.mrb[0].mxu0 %v1057
  %v1158 = vpop.f32.mrb[0].mxu0
  %v1159 = vadd.f32 %v1036, %v1158
  %v1160 = vpop.f32.mrb[0].mxu0
  %1161 = vmatprep.mubr.f32.mxu0 0.0
  %1162 = vmatmul.mubr.f32.gmra.mrb[0].mxu0 %v1060
  %v1163 = vpop.f32.mrb[0].mxu0
  %v1164 = vadd.f32 %v1036, %v1163
  %v1165 = vpop.f32.mrb[0].mxu0
  %1166 = vdwg.mxu0
  %1167 = vst [vmem:[#allocation2] sm:$0xff] %v1129
  %1168 = vst [vmem:[#allocation2 + $0x8] sm:$0xff] %v1134
  %1169 = vst [vmem:[#allocation2 + $0x10] sm:$0xff] %v1139
  %1170 = vst [vmem:[#allocation2 + $0x18] sm:$0xff] %v1144
  %1171 = vst [vmem:[#allocation2 + $0x20] sm:$0xff] %v1149
  %1172 = vst [vmem:[#allocation2 + $0x28] sm:$0xff] %v1154
  %1173 = vst [vmem:[#allocation2 + $0x30] sm:$0xff] %v1159
  %1174 = vst [vmem:[#allocation2 + $0x38] sm:$0xff] %v1164
  %v1175 = vld [vmem:[%s5] sm:$0xff]
  %v1176 = vld [vmem:[%s5 + $0x8] sm:$0xff]
  %v1177 = vld [vmem:[%s5 + $0x10] sm:$0xff]
  %v1178 = vld [vmem:[%s5 + $0x18] sm:$0xff]
  %v1179 = vld [vmem:[#allocation2] sm:$0xff]
  %1180 = vmatprep.subr.mxu0 0.0
  %1181 = vmatpush1.msra.mxu0 %v1175
  %1182 = vmatprep.subr.mxu0 0.0
  %1183 = vmatpush1.msra.mxu0 %v1176
  %1184 = vmatprep.subr.mxu0 0.0
  %1185 = vmatpush1.msra.mxu0 %v1177
  %1186 = vmatprep.subr.mxu0 0.0
  %1187 = vmatpush1.msra.mxu0 %v1178
  %1188 = vmatprep.subr.mxu0 0.0
  %1189 = vmatpush1.msra.mxu0 0.0
  %1190 = vmatprep.subr.mxu0 0.0
  %1191 = vmatpush1.msra.mxu0 0.0
  %1192 = vmatprep.subr.mxu0 0.0
  %1193 = vmatpush1.msra.mxu0 0.0
  %1194 = vmatprep.subr.mxu0 0.0
  %1195 = vmatpush1.msra.mxu0 0.0
  %1196 = vmatprep.subr.mxu0 0.0
  %1197 = vmatpush1.msra.mxu0 0.0
  %1198 = vmatprep.subr.mxu0 0.0
  %1199 = vmatpush1.msra.mxu0 0.0
  %1200 = vmatprep.subr.mxu0 0.0
  %1201 = vmatpush1.msra.mxu0 0.0
  %1202 = vmatprep.subr.mxu0 0.0
  %1203 = vmatpush1.msra.mxu0 0.0
  %1204 = vmatprep.subr.mxu0 0.0
  %1205 = vmatpush1.msra.mxu0 0.0
  %1206 = vmatprep.subr.mxu0 0.0
  %1207 = vmatpush1.msra.mxu0 0.0
  %1208 = vmatprep.subr.mxu0 0.0
  %1209 = vmatpush1.msra.mxu0 0.0
  %1210 = vmatprep.subr.mxu0 0.0
  %1211 = vmatpush1.msra.mxu0 0.0
  %1212 = vmatprep.subr.mxu0 0.0
  %1213 = vmatpush1.msra.mxu0 0.0
  %1214 = vmatprep.subr.mxu0 0.0
  %1215 = vmatpush1.msra.mxu0 0.0
  %1216 = vmatprep.subr.mxu0 0.0
  %1217 = vmatpush1.msra.mxu0 0.0
  %1218 = vmatprep.subr.mxu0 0.0
  %1219 = vmatpush1.msra.mxu0 0.0
  %1220 = vmatprep.subr.mxu0 0.0
  %1221 = vmatpush1.msra.mxu0 0.0
  %1222 = vmatprep.subr.mxu0 0.0
  %1223 = vmatpush1.msra.mxu0 0.0
  %1224 = vmatprep.subr.mxu0 0.0
  %1225 = vmatpush1.msra.mxu0 0.0
  %1226 = vmatprep.subr.mxu0 0.0
  %1227 = vmatpush1.msra.mxu0 0.0
  %1228 = vmatprep.subr.mxu0 0.0
  %1229 = vmatpush1.msra.mxu0 0.0
  %1230 = vmatprep.subr.mxu0 0.0
  %1231 = vmatpush1.msra.mxu0 0.0
  %1232 = vmatprep.subr.mxu0 0.0
  %1233 = vmatpush1.msra.mxu0 0.0
  %1234 = vmatprep.subr.mxu0 0.0
  %1235 = vmatpush1.msra.mxu0 0.0
  %1236 = vmatprep.subr.mxu0 0.0
  %1237 = vmatpush1.msra.mxu0 0.0
  %1238 = vmatprep.subr.mxu0 0.0
  %1239 = vmatpush1.msra.mxu0 0.0
  %1240 = vmatprep.subr.mxu0 0.0
  %1241 = vmatpush1.msra.mxu0 0.0
  %1242 = vmatprep.subr.mxu0 0.0
  %1243 = vmatpush1.msra.mxu0 0.0
  %1244 = vmatprep.mubr.f32.mxu0 0.0
  %1245 = vmatmul.mubr.f32.gmra.mrb[0].mxu0 %v196
  %v1246 = vpop.f32.mrb[0].mxu0
  %v1247 = vadd.f32 0.0, %v1246
  %v1248 = vpop.f32.mrb[0].mxu0
  %1249 = vdwg.mxu0
  %v1250 = vadd.f32 %v1179, %v1247
  %v1251 = vxor.u32 %v1250, 2147483648
  %v1252 = vmul.f32 %v1251, 1.442695
  %v1253 = vpow.pop %v1252
  %v1254 = vadd.f32 %v1253, 1.0
  %v1255 = vrcp.pop %v1254
  %v1256 = vmul.f32 1.0, %v1255
  %v1257 = vtanh.pop %v1250
  %v1258 = vmul.f32 %v1256, 0.0
  %1260 = vrot.lane.b32.xlu0 %v1257, 64
  %v1261 = vpop.permute.xlu0 %1260
  %v1263 = vmul.f32 %v1256, %v1261
  %1265 = vrot.lane.b32.xlu0 %v1263, 32
  %v1266 = vpop.permute.xlu0 %1265
  %v1268 = vadd.f32 %v1258, %v1266
  %v1269 = vtanh.pop %v1268
  %1271 = vrot.lane.b32.xlu0 %v1269, 64
  %v1272 = vpop.permute.xlu0 %1271
  %v1274 = vmul.f32 %v1256, %v1272
  %v1275 = vld [vmem:[#allocation2 + $0x8] sm:$0xff]
  %1277 = vrot.lane.b32.xlu0 %v1274, 32
  %v1278 = vpop.permute.xlu0 %1277
  %v1279 = vsel %vm194, %v1278, 0
  %1281 = vmatprep.subr.mxu0 0.0
  %1282 = vmatpush1.msra.mxu0 %v1175
  %1283 = vmatprep.subr.mxu0 0.0
  %1284 = vmatpush1.msra.mxu0 %v1176
  %1285 = vmatprep.subr.mxu0 0.0
  %1286 = vmatpush1.msra.mxu0 %v1177
  %1287 = vmatprep.subr.mxu0 0.0
  %1288 = vmatpush1.msra.mxu0 %v1178
  %1289 = vmatprep.subr.mxu0 0.0
  %1290 = vmatpush1.msra.mxu0 0.0
  %1291 = vmatprep.subr.mxu0 0.0
  %1292 = vmatpush1.msra.mxu0 0.0
  %1293 = vmatprep.subr.mxu0 0.0
  %1294 = vmatpush1.msra.mxu0 0.0
  %1295 = vmatprep.subr.mxu0 0.0
  %1296 = vmatpush1.msra.mxu0 0.0
  %1297 = vmatprep.subr.mxu0 0.0
  %1298 = vmatpush1.msra.mxu0 0.0
  %1299 = vmatprep.subr.mxu0 0.0
  %1300 = vmatpush1.msra.mxu0 0.0
  %1301 = vmatprep.subr.mxu0 0.0
  %1302 = vmatpush1.msra.mxu0 0.0
  %1303 = vmatprep.subr.mxu0 0.0
  %1304 = vmatpush1.msra.mxu0 0.0
  %1305 = vmatprep.subr.mxu0 0.0
  %1306 = vmatpush1.msra.mxu0 0.0
  %1307 = vmatprep.subr.mxu0 0.0
  %1308 = vmatpush1.msra.mxu0 0.0
  %1309 = vmatprep.subr.mxu0 0.0
  %1310 = vmatpush1.msra.mxu0 0.0
  %1311 = vmatprep.subr.mxu0 0.0
  %1312 = vmatpush1.msra.mxu0 0.0
  %1313 = vmatprep.subr.mxu0 0.0
  %1314 = vmatpush1.msra.mxu0 0.0
  %1315 = vmatprep.subr.mxu0 0.0
  %1316 = vmatpush1.msra.mxu0 0.0
  %1317 = vmatprep.subr.mxu0 0.0
  %1318 = vmatpush1.msra.mxu0 0.0
  %1319 = vmatprep.subr.mxu0 0.0
  %1320 = vmatpush1.msra.mxu0 0.0
  %1321 = vmatprep.subr.mxu0 0.0
  %1322 = vmatpush1.msra.mxu0 0.0
  %1323 = vmatprep.subr.mxu0 0.0
  %1324 = vmatpush1.msra.mxu0 0.0
  %1325 = vmatprep.subr.mxu0 0.0
  %1326 = vmatpush1.msra.mxu0 0.0
  %1327 = vmatprep.subr.mxu0 0.0
  %1328 = vmatpush1.msra.mxu0 0.0
  %1329 = vmatprep.subr.mxu0 0.0
  %1330 = vmatpush1.msra.mxu0 0.0
  %1331 = vmatprep.subr.mxu0 0.0
  %1332 = vmatpush1.msra.mxu0 0.0
  %1333 = vmatprep.subr.mxu0 0.0
  %1334 = vmatpush1.msra.mxu0 0.0
  %1335 = vmatprep.subr.mxu0 0.0
  %1336 = vmatpush1.msra.mxu0 0.0
  %1337 = vmatprep.subr.mxu0 0.0
  %1338 = vmatpush1.msra.mxu0 0.0
  %1339 = vmatprep.subr.mxu0 0.0
  %1340 = vmatpush1.msra.mxu0 0.0
  %1341 = vmatprep.subr.mxu0 0.0
  %1342 = vmatpush1.msra.mxu0 0.0
  %1343 = vmatprep.subr.mxu0 0.0
  %1344 = vmatpush1.msra.mxu0 0.0
  %1345 = vmatprep.mubr.f32.mxu0 0.0
  %1346 = vmatmul.mubr.f32.gmra.mrb[0].mxu0 %v1279
  %v1347 = vpop.f32.mrb[0].mxu0
  %v1348 = vadd.f32 0.0, %v1347
  %v1349 = vpop.f32.mrb[0].mxu0
  %1350 = vdwg.mxu0
  %v1351 = vadd.f32 %v1275, %v1348
  %v1352 = vxor.u32 %v1351, 2147483648
  %v1353 = vmul.f32 %v1352, 1.442695
  %v1354 = vpow.pop %v1353
  %v1355 = vadd.f32 %v1354, 1.0
  %v1356 = vrcp.pop %v1355
  %v1357 = vmul.f32 1.0, %v1356
  %v1358 = vtanh.pop %v1351
  %v1359 = vmul.f32 %v1357, %v1268
  %1361 = vrot.lane.b32.xlu0 %v1358, 64
  %v1362 = vpop.permute.xlu0 %1361
  %v1364 = vmul.f32 %v1357, %v1362
  %1366 = vrot.lane.b32.xlu0 %v1364, 32
  %v1367 = vpop.permute.xlu0 %1366
  %v1369 = vadd.f32 %v1359, %v1367
  %v1370 = vtanh.pop %v1369
  %1372 = vrot.lane.b32.xlu0 %v1370, 64
  %v1373 = vpop.permute.xlu0 %1372
  %v1375 = vmul.f32 %v1357, %v1373
  %v1376 = vld [vmem:[#allocation2 + $0x10] sm:$0xff]
  %1378 = vrot.lane.b32.xlu0 %v1375, 32
  %v1379 = vpop.permute.xlu0 %1378
  %v1380 = vsel %vm194, %v1379, 0
  %1382 = vmatprep.subr.mxu0 0.0
  %1383 = vmatpush1.msra.mxu0 %v1175
  %1384 = vmatprep.subr.mxu0 0.0
  %1385 = vmatpush1.msra.mxu0 %v1176
  %1386 = vmatprep.subr.mxu0 0.0
  %1387 = vmatpush1.msra.mxu0 %v1177
  %1388 = vmatprep.subr.mxu0 0.0
  %1389 = vmatpush1.msra.mxu0 %v1178
  %1390 = vmatprep.subr.mxu0 0.0
  %1391 = vmatpush1.msra.mxu0 0.0
  %1392 = vmatprep.subr.mxu0 0.0
  %1393 = vmatpush1.msra.mxu0 0.0
  %1394 = vmatprep.subr.mxu0 0.0
  %1395 = vmatpush1.msra.mxu0 0.0
  %1396 = vmatprep.subr.mxu0 0.0
  %1397 = vmatpush1.msra.mxu0 0.0
  %1398 = vmatprep.subr.mxu0 0.0
  %1399 = vmatpush1.msra.mxu0 0.0
  %1400 = vmatprep.subr.mxu0 0.0
  %1401 = vmatpush1.msra.mxu0 0.0
  %1402 = vmatprep.subr.mxu0 0.0
  %1403 = vmatpush1.msra.mxu0 0.0
  %1404 = vmatprep.subr.mxu0 0.0
  %1405 = vmatpush1.msra.mxu0 0.0
  %1406 = vmatprep.subr.mxu0 0.0
  %1407 = vmatpush1.msra.mxu0 0.0
  %1408 = vmatprep.subr.mxu0 0.0
  %1409 = vmatpush1.msra.mxu0 0.0
  %1410 = vmatprep.subr.mxu0 0.0
  %1411 = vmatpush1.msra.mxu0 0.0
  %1412 = vmatprep.subr.mxu0 0.0
  %1413 = vmatpush1.msra.mxu0 0.0
  %1414 = vmatprep.subr.mxu0 0.0
  %1415 = vmatpush1.msra.mxu0 0.0
  %1416 = vmatprep.subr.mxu0 0.0
  %1417 = vmatpush1.msra.mxu0 0.0
  %1418 = vmatprep.subr.mxu0 0.0
  %1419 = vmatpush1.msra.mxu0 0.0
  %1420 = vmatprep.subr.mxu0 0.0
  %1421 = vmatpush1.msra.mxu0 0.0
  %1422 = vmatprep.subr.mxu0 0.0
  %1423 = vmatpush1.msra.mxu0 0.0
  %1424 = vmatprep.subr.mxu0 0.0
  %1425 = vmatpush1.msra.mxu0 0.0
  %1426 = vmatprep.subr.mxu0 0.0
  %1427 = vmatpush1.msra.mxu0 0.0
  %1428 = vmatprep.subr.mxu0 0.0
  %1429 = vmatpush1.msra.mxu0 0.0
  %1430 = vmatprep.subr.mxu0 0.0
  %1431 = vmatpush1.msra.mxu0 0.0
  %1432 = vmatprep.subr.mxu0 0.0
  %1433 = vmatpush1.msra.mxu0 0.0
  %1434 = vmatprep.subr.mxu0 0.0
  %1435 = vmatpush1.msra.mxu0 0.0
  %1436 = vmatprep.subr.mxu0 0.0
  %1437 = vmatpush1.msra.mxu0 0.0
  %1438 = vmatprep.subr.mxu0 0.0
  %1439 = vmatpush1.msra.mxu0 0.0
  %1440 = vmatprep.subr.mxu0 0.0
  %1441 = vmatpush1.msra.mxu0 0.0
  %1442 = vmatprep.subr.mxu0 0.0
  %1443 = vmatpush1.msra.mxu0 0.0
  %1444 = vmatprep.subr.mxu0 0.0
  %1445 = vmatpush1.msra.mxu0 0.0
  %1446 = vmatprep.mubr.f32.mxu0 0.0
  %1447 = vmatmul.mubr.f32.gmra.mrb[0].mxu0 %v1380
  %v1448 = vpop.f32.mrb[0].mxu0
  %v1449 = vadd.f32 0.0, %v1448
  %v1450 = vpop.f32.mrb[0].mxu0
  %1451 = vdwg.mxu0
  %v1452 = vadd.f32 %v1376, %v1449
  %v1453 = vxor.u32 %v1452, 2147483648
  %v1454 = vmul.f32 %v1453, 1.442695
  %v1455 = vpow.pop %v1454
  %v1456 = vadd.f32 %v1455, 1.0
  %v1457 = vrcp.pop %v1456
  %v1458 = vmul.f32 1.0, %v1457
  %v1459 = vtanh.pop %v1452
  %v1460 = vmul.f32 %v1458, %v1369
  %1462 = vrot.lane.b32.xlu0 %v1459, 64
  %v1463 = vpop.permute.xlu0 %1462
  %v1465 = vmul.f32 %v1458, %v1463
  %1467 = vrot.lane.b32.xlu0 %v1465, 32
  %v1468 = vpop.permute.xlu0 %1467
  %v1470 = vadd.f32 %v1460, %v1468
  %v1471 = vtanh.pop %v1470
  %1473 = vrot.lane.b32.xlu0 %v1471, 64
  %v1474 = vpop.permute.xlu0 %1473
  %v1476 = vmul.f32 %v1458, %v1474
  %v1477 = vld [vmem:[#allocation2 + $0x18] sm:$0xff]
  %1479 = vrot.lane.b32.xlu0 %v1476, 32
  %v1480 = vpop.permute.xlu0 %1479
  %v1481 = vsel %vm194, %v1480, 0
  %1483 = vmatprep.subr.mxu0 0.0
  %1484 = vmatpush1.msra.mxu0 %v1175
  %1485 = vmatprep.subr.mxu0 0.0
  %1486 = vmatpush1.msra.mxu0 %v1176
  %1487 = vmatprep.subr.mxu0 0.0
  %1488 = vmatpush1.msra.mxu0 %v1177
  %1489 = vmatprep.subr.mxu0 0.0
  %1490 = vmatpush1.msra.mxu0 %v1178
  %1491 = vmatprep.subr.mxu0 0.0
  %1492 = vmatpush1.msra.mxu0 0.0
  %1493 = vmatprep.subr.mxu0 0.0
  %1494 = vmatpush1.msra.mxu0 0.0
  %1495 = vmatprep.subr.mxu0 0.0
  %1496 = vmatpush1.msra.mxu0 0.0
  %1497 = vmatprep.subr.mxu0 0.0
  %1498 = vmatpush1.msra.mxu0 0.0
  %1499 = vmatprep.subr.mxu0 0.0
  %1500 = vmatpush1.msra.mxu0 0.0
  %1501 = vmatprep.subr.mxu0 0.0
  %1502 = vmatpush1.msra.mxu0 0.0
  %1503 = vmatprep.subr.mxu0 0.0
  %1504 = vmatpush1.msra.mxu0 0.0
  %1505 = vmatprep.subr.mxu0 0.0
  %1506 = vmatpush1.msra.mxu0 0.0
  %1507 = vmatprep.subr.mxu0 0.0
  %1508 = vmatpush1.msra.mxu0 0.0
  %1509 = vmatprep.subr.mxu0 0.0
  %1510 = vmatpush1.msra.mxu0 0.0
  %1511 = vmatprep.subr.mxu0 0.0
  %1512 = vmatpush1.msra.mxu0 0.0
  %1513 = vmatprep.subr.mxu0 0.0
  %1514 = vmatpush1.msra.mxu0 0.0
  %1515 = vmatprep.subr.mxu0 0.0
  %1516 = vmatpush1.msra.mxu0 0.0
  %1517 = vmatprep.subr.mxu0 0.0
  %1518 = vmatpush1.msra.mxu0 0.0
  %1519 = vmatprep.subr.mxu0 0.0
  %1520 = vmatpush1.msra.mxu0 0.0
  %1521 = vmatprep.subr.mxu0 0.0
  %1522 = vmatpush1.msra.mxu0 0.0
  %1523 = vmatprep.subr.mxu0 0.0
  %1524 = vmatpush1.msra.mxu0 0.0
  %1525 = vmatprep.subr.mxu0 0.0
  %1526 = vmatpush1.msra.mxu0 0.0
  %1527 = vmatprep.subr.mxu0 0.0
  %1528 = vmatpush1.msra.mxu0 0.0
  %1529 = vmatprep.subr.mxu0 0.0
  %1530 = vmatpush1.msra.mxu0 0.0
  %1531 = vmatprep.subr.mxu0 0.0
  %1532 = vmatpush1.msra.mxu0 0.0
  %1533 = vmatprep.subr.mxu0 0.0
  %1534 = vmatpush1.msra.mxu0 0.0
  %1535 = vmatprep.subr.mxu0 0.0
  %1536 = vmatpush1.msra.mxu0 0.0
  %1537 = vmatprep.subr.mxu0 0.0
  %1538 = vmatpush1.msra.mxu0 0.0
  %1539 = vmatprep.subr.mxu0 0.0
  %1540 = vmatpush1.msra.mxu0 0.0
  %1541 = vmatprep.subr.mxu0 0.0
  %1542 = vmatpush1.msra.mxu0 0.0
  %1543 = vmatprep.subr.mxu0 0.0
  %1544 = vmatpush1.msra.mxu0 0.0
  %1545 = vmatprep.subr.mxu0 0.0
  %1546 = vmatpush1.msra.mxu0 0.0
  %1547 = vmatprep.mubr.f32.mxu0 0.0
  %1548 = vmatmul.mubr.f32.gmra.mrb[0].mxu0 %v1481
  %v1549 = vpop.f32.mrb[0].mxu0
  %v1550 = vadd.f32 0.0, %v1549
  %v1551 = vpop.f32.mrb[0].mxu0
  %1552 = vdwg.mxu0
  %v1553 = vadd.f32 %v1477, %v1550
  %v1554 = vxor.u32 %v1553, 2147483648
  %v1555 = vmul.f32 %v1554, 1.442695
  %v1556 = vpow.pop %v1555
  %v1557 = vadd.f32 %v1556, 1.0
  %v1558 = vrcp.pop %v1557
  %v1559 = vmul.f32 1.0, %v1558
  %v1560 = vtanh.pop %v1553
  %v1561 = vmul.f32 %v1559, %v1470
  %1563 = vrot.lane.b32.xlu0 %v1560, 64
  %v1564 = vpop.permute.xlu0 %1563
  %v1566 = vmul.f32 %v1559, %v1564
  %1568 = vrot.lane.b32.xlu0 %v1566, 32
  %v1569 = vpop.permute.xlu0 %1568
  %v1571 = vadd.f32 %v1561, %v1569
  %v1572 = vtanh.pop %v1571
  %1574 = vrot.lane.b32.xlu0 %v1572, 64
  %v1575 = vpop.permute.xlu0 %1574
  %v1577 = vmul.f32 %v1559, %v1575
  %v1578 = vld [vmem:[#allocation2 + $0x20] sm:$0xff]
  %1580 = vrot.lane.b32.xlu0 %v1577, 32
  %v1581 = vpop.permute.xlu0 %1580
  %v1582 = vsel %vm194, %v1581, 0
  %1584 = vmatprep.subr.mxu0 0.0
  %1585 = vmatpush1.msra.mxu0 %v1175
  %1586 = vmatprep.subr.mxu0 0.0
  %1587 = vmatpush1.msra.mxu0 %v1176
  %1588 = vmatprep.subr.mxu0 0.0
  %1589 = vmatpush1.msra.mxu0 %v1177
  %1590 = vmatprep.subr.mxu0 0.0
  %1591 = vmatpush1.msra.mxu0 %v1178
  %1592 = vmatprep.subr.mxu0 0.0
  %1593 = vmatpush1.msra.mxu0 0.0
  %1594 = vmatprep.subr.mxu0 0.0
  %1595 = vmatpush1.msra.mxu0 0.0
  %1596 = vmatprep.subr.mxu0 0.0
  %1597 = vmatpush1.msra.mxu0 0.0
  %1598 = vmatprep.subr.mxu0 0.0
  %1599 = vmatpush1.msra.mxu0 0.0
  %1600 = vmatprep.subr.mxu0 0.0
  %1601 = vmatpush1.msra.mxu0 0.0
  %1602 = vmatprep.subr.mxu0 0.0
  %1603 = vmatpush1.msra.mxu0 0.0
  %1604 = vmatprep.subr.mxu0 0.0
  %1605 = vmatpush1.msra.mxu0 0.0
  %1606 = vmatprep.subr.mxu0 0.0
  %1607 = vmatpush1.msra.mxu0 0.0
  %1608 = vmatprep.subr.mxu0 0.0
  %1609 = vmatpush1.msra.mxu0 0.0
  %1610 = vmatprep.subr.mxu0 0.0
  %1611 = vmatpush1.msra.mxu0 0.0
  %1612 = vmatprep.subr.mxu0 0.0
  %1613 = vmatpush1.msra.mxu0 0.0
  %1614 = vmatprep.subr.mxu0 0.0
  %1615 = vmatpush1.msra.mxu0 0.0
  %1616 = vmatprep.subr.mxu0 0.0
  %1617 = vmatpush1.msra.mxu0 0.0
  %1618 = vmatprep.subr.mxu0 0.0
  %1619 = vmatpush1.msra.mxu0 0.0
  %1620 = vmatprep.subr.mxu0 0.0
  %1621 = vmatpush1.msra.mxu0 0.0
  %1622 = vmatprep.subr.mxu0 0.0
  %1623 = vmatpush1.msra.mxu0 0.0
  %1624 = vmatprep.subr.mxu0 0.0
  %1625 = vmatpush1.msra.mxu0 0.0
  %1626 = vmatprep.subr.mxu0 0.0
  %1627 = vmatpush1.msra.mxu0 0.0
  %1628 = vmatprep.subr.mxu0 0.0
  %1629 = vmatpush1.msra.mxu0 0.0
  %1630 = vmatprep.subr.mxu0 0.0
  %1631 = vmatpush1.msra.mxu0 0.0
  %1632 = vmatprep.subr.mxu0 0.0
  %1633 = vmatpush1.msra.mxu0 0.0
  %1634 = vmatprep.subr.mxu0 0.0
  %1635 = vmatpush1.msra.mxu0 0.0
  %1636 = vmatprep.subr.mxu0 0.0
  %1637 = vmatpush1.msra.mxu0 0.0
  %1638 = vmatprep.subr.mxu0 0.0
  %1639 = vmatpush1.msra.mxu0 0.0
  %1640 = vmatprep.subr.mxu0 0.0
  %1641 = vmatpush1.msra.mxu0 0.0
  %1642 = vmatprep.subr.mxu0 0.0
  %1643 = vmatpush1.msra.mxu0 0.0
  %1644 = vmatprep.subr.mxu0 0.0
  %1645 = vmatpush1.msra.mxu0 0.0
  %1646 = vmatprep.subr.mxu0 0.0
  %1647 = vmatpush1.msra.mxu0 0.0
  %1648 = vmatprep.mubr.f32.mxu0 0.0
  %1649 = vmatmul.mubr.f32.gmra.mrb[0].mxu0 %v1582
  %v1650 = vpop.f32.mrb[0].mxu0
  %v1651 = vadd.f32 0.0, %v1650
  %v1652 = vpop.f32.mrb[0].mxu0
  %1653 = vdwg.mxu0
  %v1654 = vadd.f32 %v1578, %v1651
  %v1655 = vxor.u32 %v1654, 2147483648
  %v1656 = vmul.f32 %v1655, 1.442695
  %v1657 = vpow.pop %v1656
  %v1658 = vadd.f32 %v1657, 1.0
  %v1659 = vrcp.pop %v1658
  %v1660 = vmul.f32 1.0, %v1659
  %v1661 = vtanh.pop %v1654
  %v1662 = vmul.f32 %v1660, %v1571
  %1664 = vrot.lane.b32.xlu0 %v1661, 64
  %v1665 = vpop.permute.xlu0 %1664
  %v1667 = vmul.f32 %v1660, %v1665
  %1669 = vrot.lane.b32.xlu0 %v1667, 32
  %v1670 = vpop.permute.xlu0 %1669
  %v1672 = vadd.f32 %v1662, %v1670
  %v1673 = vtanh.pop %v1672
  %1675 = vrot.lane.b32.xlu0 %v1673, 64
  %v1676 = vpop.permute.xlu0 %1675
  %v1678 = vmul.f32 %v1660, %v1676
  %v1679 = vld [vmem:[#allocation2 + $0x28] sm:$0xff]
  %1681 = vrot.lane.b32.xlu0 %v1678, 32
  %v1682 = vpop.permute.xlu0 %1681
  %v1683 = vsel %vm194, %v1682, 0
  %1685 = vmatprep.subr.mxu0 0.0
  %1686 = vmatpush1.msra.mxu0 %v1175
  %1687 = vmatprep.subr.mxu0 0.0
  %1688 = vmatpush1.msra.mxu0 %v1176
  %1689 = vmatprep.subr.mxu0 0.0
  %1690 = vmatpush1.msra.mxu0 %v1177
  %1691 = vmatprep.subr.mxu0 0.0
  %1692 = vmatpush1.msra.mxu0 %v1178
  %1693 = vmatprep.subr.mxu0 0.0
  %1694 = vmatpush1.msra.mxu0 0.0
  %1695 = vmatprep.subr.mxu0 0.0
  %1696 = vmatpush1.msra.mxu0 0.0
  %1697 = vmatprep.subr.mxu0 0.0
  %1698 = vmatpush1.msra.mxu0 0.0
  %1699 = vmatprep.subr.mxu0 0.0
  %1700 = vmatpush1.msra.mxu0 0.0
  %1701 = vmatprep.subr.mxu0 0.0
  %1702 = vmatpush1.msra.mxu0 0.0
  %1703 = vmatprep.subr.mxu0 0.0
  %1704 = vmatpush1.msra.mxu0 0.0
  %1705 = vmatprep.subr.mxu0 0.0
  %1706 = vmatpush1.msra.mxu0 0.0
  %1707 = vmatprep.subr.mxu0 0.0
  %1708 = vmatpush1.msra.mxu0 0.0
  %1709 = vmatprep.subr.mxu0 0.0
  %1710 = vmatpush1.msra.mxu0 0.0
  %1711 = vmatprep.subr.mxu0 0.0
  %1712 = vmatpush1.msra.mxu0 0.0
  %1713 = vmatprep.subr.mxu0 0.0
  %1714 = vmatpush1.msra.mxu0 0.0
  %1715 = vmatprep.subr.mxu0 0.0
  %1716 = vmatpush1.msra.mxu0 0.0
  %1717 = vmatprep.subr.mxu0 0.0
  %1718 = vmatpush1.msra.mxu0 0.0
  %1719 = vmatprep.subr.mxu0 0.0
  %1720 = vmatpush1.msra.mxu0 0.0
  %1721 = vmatprep.subr.mxu0 0.0
  %1722 = vmatpush1.msra.mxu0 0.0
  %1723 = vmatprep.subr.mxu0 0.0
  %1724 = vmatpush1.msra.mxu0 0.0
  %1725 = vmatprep.subr.mxu0 0.0
  %1726 = vmatpush1.msra.mxu0 0.0
  %1727 = vmatprep.subr.mxu0 0.0
  %1728 = vmatpush1.msra.mxu0 0.0
  %1729 = vmatprep.subr.mxu0 0.0
  %1730 = vmatpush1.msra.mxu0 0.0
  %1731 = vmatprep.subr.mxu0 0.0
  %1732 = vmatpush1.msra.mxu0 0.0
  %1733 = vmatprep.subr.mxu0 0.0
  %1734 = vmatpush1.msra.mxu0 0.0
  %1735 = vmatprep.subr.mxu0 0.0
  %1736 = vmatpush1.msra.mxu0 0.0
  %1737 = vmatprep.subr.mxu0 0.0
  %1738 = vmatpush1.msra.mxu0 0.0
  %1739 = vmatprep.subr.mxu0 0.0
  %1740 = vmatpush1.msra.mxu0 0.0
  %1741 = vmatprep.subr.mxu0 0.0
  %1742 = vmatpush1.msra.mxu0 0.0
  %1743 = vmatprep.subr.mxu0 0.0
  %1744 = vmatpush1.msra.mxu0 0.0
  %1745 = vmatprep.subr.mxu0 0.0
  %1746 = vmatpush1.msra.mxu0 0.0
  %1747 = vmatprep.subr.mxu0 0.0
  %1748 = vmatpush1.msra.mxu0 0.0
  %1749 = vmatprep.mubr.f32.mxu0 0.0
  %1750 = vmatmul.mubr.f32.gmra.mrb[0].mxu0 %v1683
  %v1751 = vpop.f32.mrb[0].mxu0
  %v1752 = vadd.f32 0.0, %v1751
  %v1753 = vpop.f32.mrb[0].mxu0
  %1754 = vdwg.mxu0
  %v1755 = vadd.f32 %v1679, %v1752
  %v1756 = vxor.u32 %v1755, 2147483648
  %v1757 = vmul.f32 %v1756, 1.442695
  %v1758 = vpow.pop %v1757
  %v1759 = vadd.f32 %v1758, 1.0
  %v1760 = vrcp.pop %v1759
  %v1761 = vmul.f32 1.0, %v1760
  %v1762 = vtanh.pop %v1755
  %v1763 = vmul.f32 %v1761, %v1672
  %1765 = vrot.lane.b32.xlu0 %v1762, 64
  %v1766 = vpop.permute.xlu0 %1765
  %v1768 = vmul.f32 %v1761, %v1766
  %1770 = vrot.lane.b32.xlu0 %v1768, 32
  %v1771 = vpop.permute.xlu0 %1770
  %v1773 = vadd.f32 %v1763, %v1771
  %v1774 = vtanh.pop %v1773
  %1776 = vrot.lane.b32.xlu0 %v1774, 64
  %v1777 = vpop.permute.xlu0 %1776
  %v1779 = vmul.f32 %v1761, %v1777
  %v1780 = vld [vmem:[#allocation2 + $0x30] sm:$0xff]
  %1782 = vrot.lane.b32.xlu0 %v1779, 32
  %v1783 = vpop.permute.xlu0 %1782
  %v1784 = vsel %vm194, %v1783, 0
  %1786 = vmatprep.subr.mxu0 0.0
  %1787 = vmatpush1.msra.mxu0 %v1175
  %1788 = vmatprep.subr.mxu0 0.0
  %1789 = vmatpush1.msra.mxu0 %v1176
  %1790 = vmatprep.subr.mxu0 0.0
  %1791 = vmatpush1.msra.mxu0 %v1177
  %1792 = vmatprep.subr.mxu0 0.0
  %1793 = vmatpush1.msra.mxu0 %v1178
  %1794 = vmatprep.subr.mxu0 0.0
  %1795 = vmatpush1.msra.mxu0 0.0
  %1796 = vmatprep.subr.mxu0 0.0
  %1797 = vmatpush1.msra.mxu0 0.0
  %1798 = vmatprep.subr.mxu0 0.0
  %1799 = vmatpush1.msra.mxu0 0.0
  %1800 = vmatprep.subr.mxu0 0.0
  %1801 = vmatpush1.msra.mxu0 0.0
  %1802 = vmatprep.subr.mxu0 0.0
  %1803 = vmatpush1.msra.mxu0 0.0
  %1804 = vmatprep.subr.mxu0 0.0
  %1805 = vmatpush1.msra.mxu0 0.0
  %1806 = vmatprep.subr.mxu0 0.0
  %1807 = vmatpush1.msra.mxu0 0.0
  %1808 = vmatprep.subr.mxu0 0.0
  %1809 = vmatpush1.msra.mxu0 0.0
  %1810 = vmatprep.subr.mxu0 0.0
  %1811 = vmatpush1.msra.mxu0 0.0
  %1812 = vmatprep.subr.mxu0 0.0
  %1813 = vmatpush1.msra.mxu0 0.0
  %1814 = vmatprep.subr.mxu0 0.0
  %1815 = vmatpush1.msra.mxu0 0.0
  %1816 = vmatprep.subr.mxu0 0.0
  %1817 = vmatpush1.msra.mxu0 0.0
  %1818 = vmatprep.subr.mxu0 0.0
  %1819 = vmatpush1.msra.mxu0 0.0
  %1820 = vmatprep.subr.mxu0 0.0
  %1821 = vmatpush1.msra.mxu0 0.0
  %1822 = vmatprep.subr.mxu0 0.0
  %1823 = vmatpush1.msra.mxu0 0.0
  %1824 = vmatprep.subr.mxu0 0.0
  %1825 = vmatpush1.msra.mxu0 0.0
  %1826 = vmatprep.subr.mxu0 0.0
  %1827 = vmatpush1.msra.mxu0 0.0
  %1828 = vmatprep.subr.mxu0 0.0
  %1829 = vmatpush1.msra.mxu0 0.0
  %1830 = vmatprep.subr.mxu0 0.0
  %1831 = vmatpush1.msra.mxu0 0.0
  %1832 = vmatprep.subr.mxu0 0.0
  %1833 = vmatpush1.msra.mxu0 0.0
  %1834 = vmatprep.subr.mxu0 0.0
  %1835 = vmatpush1.msra.mxu0 0.0
  %1836 = vmatprep.subr.mxu0 0.0
  %1837 = vmatpush1.msra.mxu0 0.0
  %1838 = vmatprep.subr.mxu0 0.0
  %1839 = vmatpush1.msra.mxu0 0.0
  %1840 = vmatprep.subr.mxu0 0.0
  %1841 = vmatpush1.msra.mxu0 0.0
  %1842 = vmatprep.subr.mxu0 0.0
  %1843 = vmatpush1.msra.mxu0 0.0
  %1844 = vmatprep.subr.mxu0 0.0
  %1845 = vmatpush1.msra.mxu0 0.0
  %1846 = vmatprep.subr.mxu0 0.0
  %1847 = vmatpush1.msra.mxu0 0.0
  %1848 = vmatprep.subr.mxu0 0.0
  %1849 = vmatpush1.msra.mxu0 0.0
  %1850 = vmatprep.mubr.f32.mxu0 0.0
  %1851 = vmatmul.mubr.f32.gmra.mrb[0].mxu0 %v1784
  %v1852 = vpop.f32.mrb[0].mxu0
  %v1853 = vadd.f32 0.0, %v1852
  %v1854 = vpop.f32.mrb[0].mxu0
  %1855 = vdwg.mxu0
  %v1856 = vadd.f32 %v1780, %v1853
  %v1857 = vxor.u32 %v1856, 2147483648
  %v1858 = vmul.f32 %v1857, 1.442695
  %v1859 = vpow.pop %v1858
  %v1860 = vadd.f32 %v1859, 1.0
  %v1861 = vrcp.pop %v1860
  %v1862 = vmul.f32 1.0, %v1861
  %v1863 = vtanh.pop %v1856
  %v1864 = vmul.f32 %v1862, %v1773
  %1866 = vrot.lane.b32.xlu0 %v1863, 64
  %v1867 = vpop.permute.xlu0 %1866
  %v1869 = vmul.f32 %v1862, %v1867
  %1871 = vrot.lane.b32.xlu0 %v1869, 32
  %v1872 = vpop.permute.xlu0 %1871
  %v1874 = vadd.f32 %v1864, %v1872
  %v1875 = vtanh.pop %v1874
  %1877 = vrot.lane.b32.xlu0 %v1875, 64
  %v1878 = vpop.permute.xlu0 %1877
  %v1880 = vmul.f32 %v1862, %v1878
  %v1881 = vld [vmem:[#allocation2 + $0x38] sm:$0xff]
  %1883 = vrot.lane.b32.xlu0 %v1880, 32
  %v1884 = vpop.permute.xlu0 %1883
  %v1885 = vsel %vm194, %v1884, 0
  %1887 = vmatprep.subr.mxu0 0.0
  %1888 = vmatpush1.msra.mxu0 %v1175
  %1889 = vmatprep.subr.mxu0 0.0
  %1890 = vmatpush1.msra.mxu0 %v1176
  %1891 = vmatprep.subr.mxu0 0.0
  %1892 = vmatpush1.msra.mxu0 %v1177
  %1893 = vmatprep.subr.mxu0 0.0
  %1894 = vmatpush1.msra.mxu0 %v1178
  %1895 = vmatprep.subr.mxu0 0.0
  %1896 = vmatpush1.msra.mxu0 0.0
  %1897 = vmatprep.subr.mxu0 0.0
  %1898 = vmatpush1.msra.mxu0 0.0
  %1899 = vmatprep.subr.mxu0 0.0
  %1900 = vmatpush1.msra.mxu0 0.0
  %1901 = vmatprep.subr.mxu0 0.0
  %1902 = vmatpush1.msra.mxu0 0.0
  %1903 = vmatprep.subr.mxu0 0.0
  %1904 = vmatpush1.msra.mxu0 0.0
  %1905 = vmatprep.subr.mxu0 0.0
  %1906 = vmatpush1.msra.mxu0 0.0
  %1907 = vmatprep.subr.mxu0 0.0
  %1908 = vmatpush1.msra.mxu0 0.0
  %1909 = vmatprep.subr.mxu0 0.0
  %1910 = vmatpush1.msra.mxu0 0.0
  %1911 = vmatprep.subr.mxu0 0.0
  %1912 = vmatpush1.msra.mxu0 0.0
  %1913 = vmatprep.subr.mxu0 0.0
  %1914 = vmatpush1.msra.mxu0 0.0
  %1915 = vmatprep.subr.mxu0 0.0
  %1916 = vmatpush1.msra.mxu0 0.0
  %1917 = vmatprep.subr.mxu0 0.0
  %1918 = vmatpush1.msra.mxu0 0.0
  %1919 = vmatprep.subr.mxu0 0.0
  %1920 = vmatpush1.msra.mxu0 0.0
  %1921 = vmatprep.subr.mxu0 0.0
  %1922 = vmatpush1.msra.mxu0 0.0
  %1923 = vmatprep.subr.mxu0 0.0
  %1924 = vmatpush1.msra.mxu0 0.0
  %1925 = vmatprep.subr.mxu0 0.0
  %1926 = vmatpush1.msra.mxu0 0.0
  %1927 = vmatprep.subr.mxu0 0.0
  %1928 = vmatpush1.msra.mxu0 0.0
  %1929 = vmatprep.subr.mxu0 0.0
  %1930 = vmatpush1.msra.mxu0 0.0
  %1931 = vmatprep.subr.mxu0 0.0
  %1932 = vmatpush1.msra.mxu0 0.0
  %1933 = vmatprep.subr.mxu0 0.0
  %1934 = vmatpush1.msra.mxu0 0.0
  %1935 = vmatprep.subr.mxu0 0.0
  %1936 = vmatpush1.msra.mxu0 0.0
  %1937 = vmatprep.subr.mxu0 0.0
  %1938 = vmatpush1.msra.mxu0 0.0
  %1939 = vmatprep.subr.mxu0 0.0
  %1940 = vmatpush1.msra.mxu0 0.0
  %1941 = vmatprep.subr.mxu0 0.0
  %1942 = vmatpush1.msra.mxu0 0.0
  %1943 = vmatprep.subr.mxu0 0.0
  %1944 = vmatpush1.msra.mxu0 0.0
  %1945 = vmatprep.subr.mxu0 0.0
  %1946 = vmatpush1.msra.mxu0 0.0
  %1947 = vmatprep.subr.mxu0 0.0
  %1948 = vmatpush1.msra.mxu0 0.0
  %1949 = vmatprep.subr.mxu0 0.0
  %1950 = vmatpush1.msra.mxu0 0.0
  %1951 = vmatprep.mubr.f32.mxu0 0.0
  %1952 = vmatmul.mubr.f32.gmra.mrb[0].mxu0 %v1885
  %v1953 = vpop.f32.mrb[0].mxu0
  %v1954 = vadd.f32 0.0, %v1953
  %v1955 = vpop.f32.mrb[0].mxu0
  %1956 = vdwg.mxu0
  %v1957 = vadd.f32 %v1881, %v1954
  %v1958 = vxor.u32 %v1957, 2147483648
  %v1959 = vmul.f32 %v1958, 1.442695
  %v1960 = vpow.pop %v1959
  %v1961 = vadd.f32 %v1960, 1.0
  %v1962 = vrcp.pop %v1961
  %v1963 = vmul.f32 1.0, %v1962
  %v1964 = vtanh.pop %v1957
  %v1965 = vmul.f32 %v1963, %v1874
  %1967 = vrot.lane.b32.xlu0 %v1964, 64
  %v1968 = vpop.permute.xlu0 %1967
  %v1970 = vmul.f32 %v1963, %v1968
  %1972 = vrot.lane.b32.xlu0 %v1970, 32
  %v1973 = vpop.permute.xlu0 %1972
  %v1975 = vadd.f32 %v1965, %v1973
  %v1976 = vtanh.pop %v1975
  %1978 = vrot.lane.b32.xlu0 %v1976, 64
  %v1979 = vpop.permute.xlu0 %1978
  %v1981 = vmul.f32 %v1963, %v1979
  %v1982 = vld [vmem:[%s7] sm:$0x1]
  %v1984 = vlaneseq
  %v1985 = vshrl.u32 %v1984, 7
  %v1986 = vsub.s32 0, %v1985
  %v1987 = vrot.slane %v1982, %v1986
  %1988 = vrot.lane.b32.xlu0 %v1987, 96
  %v1989 = vpop.permute.xlu0 %1988
  %v1991 = vmul.f32 %v1981, %v1989
  %1993 = vrot.lane.b32.xlu0 %v1991, 32
  %v1994 = vpop.permute.xlu0 %1993
  %v1996 = vsel %vm194, %v1994, 0.0
  %1997 = vadd.xlane.f32.xlu0 %v1996
  %v1998 = vpop.xlane.xlu0 %1997
  %v1999 = vld [vmem:[#allocation4] sm:$0x1]
  %v2001 = vlaneseq
  %v2002 = vshrl.u32 %v2001, 7
  %v2003 = vsub.s32 0, %v2002
  %v2004 = vrot.slane %v1999, %v2003
  %v2006 = vadd.f32 %v1998, %v2004
  %v2007 = vxor.u32 %v2006, 2147483648
  %v2008 = vmul.f32 %v2007, 1.442695
  %v2009 = vpow.pop %v2008
  %v2010 = vadd.f32 %v2009, 1.0
  %v2011 = vrcp.pop %v2010
  %v2012 = vmul.f32 1.0, %v2011
  %vm2013 = vcmask 7168
  %2014 = vst.msk [vmem:[%s9] sm:$0xff] %vm2013, %v2012
  // Predicated region
  $region38: #{lstm_cls_forward.1} parent=0 // pred_check
    _
  $region39: #{lstm_cls_forward.1} parent=0 // pred_check_branch
    %2016 = sbr.rel (0) target = $region41
  $region40: #{lstm_cls_forward.1} parent=0 // pred_region
    _
  $region41: #{lstm_cls_forward.1} parent=0 // pred_fallthru
    _
  // Predicated region
  $region42: #{lstm_cls_forward.1} parent=0 // pred_check
    _
  $region43: #{lstm_cls_forward.1} parent=0 // pred_check_branch
    %2018 = sbr.rel (0) target = $region45
  $region44: #{lstm_cls_forward.1} parent=0 // pred_region
    _
  $region45: #{lstm_cls_forward.1} parent=0 // pred_fallthru
    _

</llo_original>
